<compile_context>
chip_gen: v5e
topology: v5e:2x2
jax: 0.10.0
libtpu: 0.0.40
codegen_flags: <defaults>
</compile_context>

<pallas_src>
import functools
import math

import jax
import jax.numpy as jnp
from jax import lax
from jax.experimental import pallas as pl
from jax.experimental.pallas import tpu as pltpu


def _round_up(x, m):
    return ((x + m - 1) // m) * m


# --------------------------------------------------------------------------
# Pallas kernel
# --------------------------------------------------------------------------
def _silhouette_kernel(chunk_cull_ref, tile_cull_ref,       # SMEM (scalar prefetch)
                       face_ref, pix_ref,                   # VMEM inputs
                       o_ref,                               # VMEM output
                       pxb_ref, pyb_ref, keep_ref,          # VMEM scratch
                       *, sigma, hard, n_chunks):
    """One (batch, pixel-tile) grid step.

    chunk_cull_ref: (B, 2*NCH) int32 -- per face-chunk [y_lo | y_hi] (scaled).
    tile_cull_ref:  (2, NPT)   int32 -- per pixel-tile y_lo / y_hi (scaled).
    face_ref: (1, 16, Fpad) VMEM -- per-face edge channels, faces lane-dense:
              rows [ax,ay,ex,ey,1/|e|^2] x 3 edges (+1 pad row).
    pix_ref:  (TILE_P, 2)   VMEM -- pixel NDC centres (col 0 = x, col 1 = y).
    o_ref:    (1, TILE_P, 1) VMEM -- silhouette alpha for this pixel tile.
    scratch:  three (TILE_P, FCHUNK) f32 buffers (px splat, py splat, keep prod).
    """
    tile_p, fchunk = keep_ref.shape
    b = pl.program_id(0)
    p = pl.program_id(1)

    # ---- per-pixel-tile init: splat px/py across face lanes ONCE ----------
    pxb_ref[...] = jnp.broadcast_to(pix_ref[:, 0:1], (tile_p, fchunk))
    pyb_ref[...] = jnp.broadcast_to(pix_ref[:, 1:2], (tile_p, fchunk))
    keep_ref[...] = jnp.ones_like(keep_ref)

    t_lo = tile_cull_ref[0, p]
    t_hi = tile_cull_ref[1, p]

    # ---- reduction over face chunks (in-kernel loop, culled per chunk) ----
    def chunk_body(i, carry):
        c_lo = chunk_cull_ref[b, i]
        c_hi = chunk_cull_ref[b, n_chunks + i]

        @pl.when(jnp.logical_and(c_lo <= t_hi, c_hi >= t_lo))
        def _():
            off = pl.multiple_of(i * fchunk, fchunk)
            px = pxb_ref[...]                      # (TILE_P, FCHUNK)
            py = pyb_ref[...]

            def chan(r):
                # lane-dense (1, FCHUNK) row; broadcasts cheaply over sublanes.
                return face_ref[0, r:r + 1, pl.ds(off, fchunk)]

            emin = None
            emax = None
            dmin = None
            for c in (0, 5, 10):                   # incremental over the 3 edges
                ax = chan(c + 0)
                ay = chan(c + 1)
                ex = chan(c + 2)
                ey = chan(c + 3)
                dx = px - ax
                dy = py - ay
                cross = ex * dy - ey * dx          # edge function (sign -> inside)
                emin = cross if emin is None else jnp.minimum(emin, cross)
                emax = cross if emax is None else jnp.maximum(emax, cross)
                if not hard:
                    il = chan(c + 4)               # 1/|e|^2 hoisted to the wrapper
                    t = jnp.clip((dx * ex + dy * ey) * il, 0.0, 1.0)
                    qx = dx - t * ex
                    qy = dy - t * ey
                    d = qx * qx + qy * qy          # sq. distance to edge segment
                    dmin = d if dmin is None else jnp.minimum(dmin, d)

            inside = (emin >= 0.0) | (emax <= 0.0)
            if hard:
                # sigma -> 0 limit: covered iff inside any face.
                keep_ref[...] = jnp.where(inside, 0.0, keep_ref[...])
            else:
                dist = jnp.where(inside, -dmin, dmin)       # signed sq. distance
                prob = jax.nn.sigmoid(dist * jnp.float32(-1.0 / sigma))
                keep_ref[...] = keep_ref[...] * (1.0 - prob)

        return carry

    lax.fori_loop(0, n_chunks, chunk_body, 0)

    # ---- finalize: product over the face (lane) axis, once per tile -------
    k = keep_ref[...]
    acc = k[:, 0:128]
    for s in range(1, fchunk // 128):              # fold lane groups (VALU)
        acc = acc * k[:, s * 128:(s + 1) * 128]
    for sh in (1, 2, 4, 8, 16, 32, 64):            # butterfly product via XLU rolls
        acc = acc * pltpu.roll(acc, shift=sh, axis=1)
    # Every lane now holds the full product; store the (TILE_P, 1) column.
    # (Narrow store, but it happens once per tile -> negligible.)
    o_ref[0, :, :] = 1.0 - acc[:, 0:1]


# --------------------------------------------------------------------------
# Plain-JAX glue: camera projection, face gather, packing, cull tables
# --------------------------------------------------------------------------
def _pack_face_channels(face_xy):
    """(B, Fpad, 3, 2) -> (B, 16, Fpad): [ax,ay,ex,ey,1/|e|^2] x 3 edges + pad."""
    v0 = face_xy[:, :, 0, :]
    v1 = face_xy[:, :, 1, :]
    v2 = face_xy[:, :, 2, :]

    def edge_chan(a, b):
        e = b - a
        inv_l2 = 1.0 / jnp.maximum(jnp.sum(e * e, axis=-1, keepdims=True), 1e-12)
        return jnp.concatenate([a, e, inv_l2], axis=-1)     # (B, Fpad, 5)

    ch = jnp.concatenate(
        [edge_chan(v0, v1), edge_chan(v1, v2), edge_chan(v2, v0)], axis=-1)
    ch = jnp.concatenate([ch, jnp.zeros_like(ch[..., :1])], axis=-1)  # (B,Fpad,16)
    return jnp.transpose(ch, (0, 2, 1)).astype(jnp.float32)           # (B,16,Fpad)


def _prepare_inputs(smpl_vertices, faces, *, image_size, f, principal_point,
                    sigma, tile_p, face_chunk):
    smpl_vertices = jnp.asarray(smpl_vertices, jnp.float32)
    faces = jnp.asarray(faces, jnp.int32)
    B = smpl_vertices.shape[0]
    F = int(faces.shape[0])
    H = W = int(image_size)
    P = H * W

    # Camera: R = diag(-1,-1,1), T = 0 (row-vector convention), SfM projection.
    verts_view = smpl_vertices * jnp.array([-1.0, -1.0, 1.0], jnp.float32)
    z = verts_view[..., 2:3]
    pp = jnp.asarray(principal_point, jnp.float32).reshape(-1)[:2]
    xy_ndc = jnp.float32(f) * verts_view[..., :2] / z + pp            # (B, V, 2)

    face_xy = xy_ndc[:, faces, :]                                     # (B, F, 3, 2)

    # Face chunking: chunks are lane-dense (multiples of 128).
    FCHUNK = max(128, _round_up(min(int(face_chunk), _round_up(F, 128)), 128))
    Fpad = _round_up(F, FCHUNK)
    NCH = Fpad // FCHUNK
    far = jnp.array([[1e3, 1e3], [1e3 + 1.0, 1e3], [1e3, 1e3 + 1.0]], jnp.float32)
    if Fpad > F:
        pad_tri = jnp.broadcast_to(far, (B, Fpad - F, 3, 2))
        face_xy = jnp.concatenate([face_xy, pad_tri], axis=1)
    # Degenerate (zero-area) faces would read as "inside everywhere"; replace
    # them with the far-away pad triangle (PyTorch3D's rasterizer culls them).
    v0 = face_xy[:, :, 0, :]
    v1 = face_xy[:, :, 1, :]
    v2 = face_xy[:, :, 2, :]
    area2 = ((v1[..., 0] - v0[..., 0]) * (v2[..., 1] - v0[..., 1])
             - (v1[..., 1] - v0[..., 1]) * (v2[..., 0] - v0[..., 0]))
    degen = (jnp.abs(area2) < 1e-12)[..., None, None]
    face_xy = jnp.where(degen, far, face_xy)

    face_ch = _pack_face_channels(face_xy)                            # (B,16,Fpad)

    # Pixel tiling: NDC centres, PyTorch3D convention (+x left, +y up).
    TILE_P = max(8, _round_up(min(int(tile_p), _round_up(P, 8)), 8))
    Ppad = _round_up(P, TILE_P)
    NPT = Ppad // TILE_P
    idx = jnp.arange(Ppad)
    col = (idx % W).astype(jnp.float32)
    row = (idx // W).astype(jnp.float32)
    px = 1.0 - (2.0 * col + 1.0) / jnp.float32(W)
    py = 1.0 - (2.0 * row + 1.0) / jnp.float32(H)
    valid = idx < P
    px = jnp.where(valid, px, 1e3)                                    # far pad px
    py = jnp.where(valid, py, 1e3)
    pix = jnp.stack([px, py], axis=-1).astype(jnp.float32)            # (Ppad, 2)

    # y-bbox culling tables (int32, conservative rounding).  Beyond
    # sqrt(104*sigma) the f32 sigmoid is exactly 0, so culling is exact.
    margin = math.sqrt(104.0 * max(float(sigma), 0.0))
    SCALE = 1024.0
    fy = face_xy[..., 1]                                              # (B,Fpad,3)
    cmin = fy.min(axis=-1).reshape(B, NCH, FCHUNK).min(axis=-1) - margin
    cmax = fy.max(axis=-1).reshape(B, NCH, FCHUNK).max(axis=-1) + margin
    c_lo = jnp.floor(jnp.clip(cmin, -3e4, 3e4) * SCALE).astype(jnp.int32)
    c_hi = jnp.ceil(jnp.clip(cmax, -3e4, 3e4) * SCALE).astype(jnp.int32)
    chunk_cull = jnp.concatenate([c_lo, c_hi], axis=-1)               # (B, 2*NCH)

    py_min = jnp.where(valid, py, 3e4).reshape(NPT, TILE_P).min(axis=-1)
    py_max = jnp.where(valid, py, -3e4).reshape(NPT, TILE_P).max(axis=-1)
    t_lo = jnp.floor(jnp.clip(py_min, -3e4, 3e4) * SCALE).astype(jnp.int32)
    t_hi = jnp.ceil(jnp.clip(py_max, -3e4, 3e4) * SCALE).astype(jnp.int32)
    tile_cull = jnp.stack([t_lo, t_hi], axis=0)                       # (2, NPT)

    dims = dict(B=B, H=H, W=W, P=P, Ppad=Ppad, TILE_P=TILE_P, NPT=NPT,
                Fpad=Fpad, FCHUNK=FCHUNK, NCH=NCH)
    return chunk_cull, tile_cull, face_ch, pix, dims


# --------------------------------------------------------------------------
# Public entry points
# --------------------------------------------------------------------------
def smpl_silhouette(smpl_vertices, faces, *, image_size, f=50.0,
                    principal_point=(0.0, 0.0), sigma=1e-9, hard=None,
                    tile_p=512, face_chunk=512):
    """Forward pass of SMPLRenderer (mode='a'): the silhouette mask.

    smpl_vertices: (B, V, 3) f32 world-space vertices.
    faces:         (F, 3)   int32 triangle vertex indices.
    hard: None -> auto (step-function path when sigma <= 1e-6, which the
          default sigma=1e-9 satisfies); True/False to force.
    Returns mask:  (B, image_size, image_size) f32 in [0, 1].
    """
    if hard is None:
        hard = float(sigma) <= 1e-6   # sigmoid(-d/sigma) is already a step fn

    chunk_cull, tile_cull, face_ch, pix, dims = _prepare_inputs(
        smpl_vertices, faces, image_size=image_size, f=f,
        principal_point=principal_point, sigma=sigma,
        tile_p=tile_p, face_chunk=face_chunk)
    B, H, W, P = dims["B"], dims["H"], dims["W"], dims["P"]
    Ppad, TILE_P, NPT = dims["Ppad"], dims["TILE_P"], dims["NPT"]
    Fpad, FCHUNK, NCH = dims["Fpad"], dims["FCHUNK"], dims["NCH"]

    kernel = functools.partial(_silhouette_kernel, sigma=float(sigma),
                               hard=bool(hard), n_chunks=NCH)

    # Advisory cost hint (ignores culling).
    work = B * Ppad * Fpad
    cost = pl.CostEstimate(
        flops=int(work * (20 if hard else 50)),
        transcendentals=0 if hard else int(work),
        bytes_accessed=int(face_ch.size * 4 + pix.size * 4 + B * Ppad * 4),
    )

    # VMEM: 3 scratch tiles + resident (double-buffered) face table + pix/out.
    # Keep the limit well under v7x's 64 MiB/TC while covering v5e/v6e needs.
    vmem_need = 4 * (3 * TILE_P * FCHUNK + 2 * 16 * Fpad + 4 * TILE_P * 128)
    vmem_limit = int(min(max(vmem_need + (2 << 20), 24 * 1024 * 1024),
                         56 * 1024 * 1024))

    out = pl.pallas_call(
        kernel,
        out_shape=jax.ShapeDtypeStruct((B, Ppad, 1), jnp.float32),
        grid_spec=pltpu.PrefetchScalarGridSpec(
            num_scalar_prefetch=2,
            grid=(B, NPT),
            in_specs=[
                # Full (transposed, lane-dense) face table, resident per batch.
                pl.BlockSpec((1, 16, Fpad), lambda b, p, cc, tc: (b, 0, 0)),
                # Pixel NDC centres for this tile (contiguous (TILE_P, 2) slab).
                pl.BlockSpec((TILE_P, 2), lambda b, p, cc, tc: (p, 0)),
            ],
            out_specs=pl.BlockSpec((1, TILE_P, 1), lambda b, p, cc, tc: (b, p, 0)),
            scratch_shapes=[pltpu.VMEM((TILE_P, FCHUNK), jnp.float32)] * 3,
        ),
        compiler_params=pltpu.CompilerParams(
            # Both grid axes are independent -> megacore-shardable (keep
            # B * NPT >= 2 and even for v7x's 2 TensorCores).
            dimension_semantics=("parallel", "parallel"),
            vmem_limit_bytes=vmem_limit,
        ),
        cost_estimate=cost,
    )(chunk_cull, tile_cull, face_ch, pix)

    return out[:, :P, 0].reshape(B, H, W)


def smpl_silhouette_ref(smpl_vertices, faces, *, image_size, f=50.0,
                        principal_point=(0.0, 0.0), sigma=1e-9, hard=False):
    """Pure-JAX reference (full broadcast) for correctness checks."""
    smpl_vertices = jnp.asarray(smpl_vertices, jnp.float32)
    faces = jnp.asarray(faces, jnp.int32)
    B = smpl_vertices.shape[0]
    H = W = int(image_size)

    verts_view = smpl_vertices * jnp.array([-1.0, -1.0, 1.0], jnp.float32)
    z = verts_view[..., 2:3]
    pp = jnp.asarray(principal_point, jnp.float32).reshape(-1)[:2]
    xy = jnp.float32(f) * verts_view[..., :2] / z + pp
    tri = xy[:, faces, :]                                             # (B,F,3,2)

    col = jnp.arange(W, dtype=jnp.float32)
    row = jnp.arange(H, dtype=jnp.float32)
    px = jnp.broadcast_to((1.0 - (2.0 * col + 1.0) / W)[None, :], (H, W)).reshape(-1)
    py = jnp.broadcast_to((1.0 - (2.0 * row + 1.0) / H)[:, None], (H, W)).reshape(-1)

    v0, v1, v2 = tri[:, :, 0, :], tri[:, :, 1, :], tri[:, :, 2, :]

    def edge(a, b):
        ax = a[..., 0][:, :, None]
        ay = a[..., 1][:, :, None]
        ex = (b - a)[..., 0][:, :, None]
        ey = (b - a)[..., 1][:, :, None]
        dx = px[None, None, :] - ax
        dy = py[None, None, :] - ay
        cross = ex * dy - ey * dx
        il = 1.0 / jnp.maximum(ex * ex + ey * ey, 1e-12)
        t = jnp.clip((dx * ex + dy * ey) * il, 0.0, 1.0)
        qx = dx - t * ex
        qy = dy - t * ey
        return cross, qx * qx + qy * qy

    e0, d0 = edge(v0, v1)
    e1, d1 = edge(v1, v2)
    e2, d2 = edge(v2, v0)
    inside = ((e0 >= 0) & (e1 >= 0) & (e2 >= 0)) | (
        (e0 <= 0) & (e1 <= 0) & (e2 <= 0))
    if hard:
        alpha = jnp.any(inside, axis=1).astype(jnp.float32)
    else:
        dmin = jnp.minimum(jnp.minimum(d0, d1), d2)
        dist = jnp.where(inside, -dmin, dmin)
        prob = jax.nn.sigmoid(dist * jnp.float32(-1.0 / float(sigma)))
        alpha = 1.0 - jnp.prod(1.0 - prob, axis=1)
    return alpha.reshape(B, H, W)


# --------------------------------------------------------------------------
# Demo / self-test
# --------------------------------------------------------------------------
def _make_grid_mesh(n=5, extent=0.3, depth=2.5):
    """Deterministic little 'SMPL-like' mesh: an n x n vertex sheet."""
    xs = jnp.linspace(-extent, extent, n)
    ys = jnp.linspace(-extent, extent, n)
    gx, gy = jnp.meshgrid(xs, ys, indexing="xy")
    verts = jnp.stack(
        [gx.reshape(-1), gy.reshape(-1), jnp.full((n * n,), depth)], axis=-1
    ).astype(jnp.float32)                                             # (n*n, 3)
    faces = []
    for i in range(n - 1):
        for j in range(n - 1):
            v00 = i * n + j
            v01 = i * n + j + 1
            v10 = (i + 1) * n + j
            v11 = (i + 1) * n + j + 1
            faces.append((v00, v10, v01))
            faces.append((v01, v10, v11))
    faces = jnp.array(faces, jnp.int32)                               # (2*(n-1)^2, 3)
    return verts, faces


if __name__ == "__main__":
    key = jax.random.PRNGKey(0)

    batch_size = 2
    image_size = 16
    focal = 2.0  # constructor default is f=50; small f keeps the toy mesh in frame

    base_verts, faces = _make_grid_mesh(n=5)                          # V=25, F=32
    V = base_verts.shape[0]

    k1, k2 = jax.random.split(key)
    noise = 0.02 * jax.random.normal(k1, (batch_size, V, 3), jnp.float32)
    shift = 0.05 * jax.random.normal(k2, (batch_size, 1, 3), jnp.float32)
    smpl_vertices = base_verts[None] + noise + shift                  # (B, V, 3)

    # Default: sigma=1e-9 auto-dispatches the hard (step-function) kernel path.
    mask = smpl_silhouette(
        smpl_vertices, faces, image_size=image_size, f=focal, sigma=1e-9)
    mask = jax.block_until_ready(mask)
    assert mask.shape == (batch_size, image_size, image_size)
    assert bool(jnp.all(jnp.isfinite(mask)))
    assert bool(jnp.all((mask >= 0.0) & (mask <= 1.0)))

    ref_hard = smpl_silhouette_ref(
        smpl_vertices, faces, image_size=image_size, f=focal, hard=True)
    frac_bad = float(jnp.mean((jnp.abs(mask - ref_hard) > 1e-2).astype(jnp.float32)))
    assert frac_bad <= 0.01, f"hard-path mismatch fraction {frac_bad}"

    # Forced soft path (SoftSilhouetteShader math with the sigmoid evaluated).
    mask_soft = smpl_silhouette(
        smpl_vertices, faces, image_size=image_size, f=focal, sigma=1e-9,
        hard=False)
    mask_soft = jax.block_until_ready(mask_soft)
    assert bool(jnp.all(jnp.isfinite(mask_soft)))
    assert bool(jnp.all((mask_soft >= 0.0) & (mask_soft <= 1.0)))
    ref_soft = smpl_silhouette_ref(
        smpl_vertices, faces, image_size=image_size, f=focal, sigma=1e-9,
        hard=False)
    frac_bad_soft = float(
        jnp.mean((jnp.abs(mask_soft - ref_soft) > 1e-2).astype(jnp.float32)))
    assert frac_bad_soft <= 0.01, f"soft-path mismatch fraction {frac_bad_soft}"
    frac_hs = float(jnp.mean((jnp.abs(mask_soft - mask) > 1e-2).astype(jnp.float32)))
    assert frac_hs <= 0.02, f"hard/soft disagreement fraction {frac_hs}"

    # Larger image with several pixel tiles: exercises the y-bbox face-chunk
    # culling (top/bottom tiles skip all face work).
    mask32 = smpl_silhouette(
        smpl_vertices, faces, image_size=32, f=focal, sigma=1e-9,
        tile_p=256, face_chunk=128)
    mask32 = jax.block_until_ready(mask32)
    ref32 = smpl_silhouette_ref(
        smpl_vertices, faces, image_size=32, f=focal, hard=True)
    frac32 = float(jnp.mean((jnp.abs(mask32 - ref32) > 1e-2).astype(jnp.float32)))
    assert frac32 <= 0.01, f"culled-path mismatch fraction {frac32}"

    print("KERNEL_OK")
</pallas_src>

<mosaic_0001>
module attributes {stable_mosaic.version = 11 : i64} {
  func.func @_silhouette_kernel(%arg0: i32, %arg1: i32, %arg2: memref<2x2xi32, #tpu.memory_space<smem>>, %arg3: memref<2x1xi32, #tpu.memory_space<smem>>, %arg4: memref<1x16x128xf32, #tpu.memory_space<vmem>>, %arg5: memref<256x2xf32, #tpu.memory_space<vmem>>, %arg6: memref<1x256x1xf32, #tpu.memory_space<vmem>>, %arg7: memref<256x128xf32, #tpu.memory_space<vmem>>, %arg8: memref<256x128xf32, #tpu.memory_space<vmem>>, %arg9: memref<256x128xf32, #tpu.memory_space<vmem>>) attributes {dimension_semantics = [#tpu.dimension_semantics<parallel>, #tpu.dimension_semantics<parallel>], iteration_bounds = array<i64: 2, 1>, scalar_prefetch = 2 : i64, scratch_operands = 3 : i64, tpu.core_type = #tpu.core_type<tc>, window_params = [{transform_indices = @transform_0, window_bounds = array<i64: 1, 16, 128>}, {transform_indices = @transform_1, window_bounds = array<i64: 256, 2>}, {transform_indices = @transform_2, window_bounds = array<i64: 1, 256, 1>}]} {
    %c0 = arith.constant 0 : index
    %c0_0 = arith.constant 0 : index
    %0 = vector.load %arg5[%c0, %c0_0] : memref<256x2xf32, #tpu.memory_space<vmem>>, vector<256x1xf32>
    %1 = vector.shape_cast %0 : vector<256x1xf32> to vector<256x1xf32>
    %2 = vector.broadcast %1 : vector<256x1xf32> to vector<256x128xf32>
    %c0_1 = arith.constant 0 : index
    %c0_2 = arith.constant 0 : index
    %3 = vector.load %arg7[%c0_1, %c0_2] : memref<256x128xf32, #tpu.memory_space<vmem>>, vector<256x128xf32>
    tpu.vector_store %arg7[%c0_1, %c0_2], %2 {strides = array<i32>} : memref<256x128xf32, #tpu.memory_space<vmem>>, vector<256x128xf32>,
    %c0_3 = arith.constant 0 : index
    %c1 = arith.constant 1 : index
    %4 = vector.load %arg5[%c0_3, %c1] : memref<256x2xf32, #tpu.memory_space<vmem>>, vector<256x1xf32>
    %5 = vector.shape_cast %4 : vector<256x1xf32> to vector<256x1xf32>
    %6 = vector.broadcast %5 : vector<256x1xf32> to vector<256x128xf32>
    %c0_4 = arith.constant 0 : index
    %c0_5 = arith.constant 0 : index
    %7 = vector.load %arg8[%c0_4, %c0_5] : memref<256x128xf32, #tpu.memory_space<vmem>>, vector<256x128xf32>
    tpu.vector_store %arg8[%c0_4, %c0_5], %6 {strides = array<i32>} : memref<256x128xf32, #tpu.memory_space<vmem>>, vector<256x128xf32>,
    %cst = arith.constant 1.000000e+00 : f32
    %8 = vector.broadcast %cst : f32 to vector<256x128xf32>
    %c0_6 = arith.constant 0 : index
    %c0_7 = arith.constant 0 : index
    %9 = vector.load %arg9[%c0_6, %c0_7] : memref<256x128xf32, #tpu.memory_space<vmem>>, vector<256x128xf32>
    tpu.vector_store %arg9[%c0_6, %c0_7], %8 {strides = array<i32>} : memref<256x128xf32, #tpu.memory_space<vmem>>, vector<256x128xf32>,
    %c0_8 = arith.constant 0 : index
    %10 = arith.index_cast %arg1 : i32 to index
    %11 = memref.load %arg3[%c0_8, %10] : memref<2x1xi32, #tpu.memory_space<smem>>
    %c1_9 = arith.constant 1 : index
    %12 = arith.index_cast %arg1 : i32 to index
    %13 = memref.load %arg3[%c1_9, %12] : memref<2x1xi32, #tpu.memory_space<smem>>
    %c0_i32 = arith.constant 0 : i32
    %14 = arith.index_cast %arg0 : i32 to index
    %15 = arith.index_cast %c0_i32 : i32 to index
    %16 = memref.load %arg2[%14, %15] : memref<2x2xi32, #tpu.memory_space<smem>>
    %c1_i32 = arith.constant 1 : i32
    %17 = arith.addi %c1_i32, %c0_i32 : i32
    %18 = arith.index_cast %arg0 : i32 to index
    %19 = arith.index_cast %17 : i32 to index
    %20 = memref.load %arg2[%18, %19] : memref<2x2xi32, #tpu.memory_space<smem>>
    %21 = arith.cmpi sle, %16, %13 : i32
    %22 = arith.cmpi sge, %20, %11 : i32
    %23 = arith.andi %21, %22 : i1
    %24 = arith.extui %23 : i1 to i32
    %c0_i32_10 = arith.constant 0 : i32
    %25 = arith.cmpi ne, %24, %c0_i32_10 : i32
    scf.if %25 {
      %c128_i32 = arith.constant 128 : i32
      %47 = arith.muli %c0_i32, %c128_i32 : i32
      %48 = tpu.assume_multiple %47, 128 : i32
      %c0_19 = arith.constant 0 : index
      %c0_20 = arith.constant 0 : index
      %49 = vector.load %arg7[%c0_19, %c0_20] : memref<256x128xf32, #tpu.memory_space<vmem>>, vector<256x128xf32>
      %c0_21 = arith.constant 0 : index
      %c0_22 = arith.constant 0 : index
      %50 = vector.load %arg8[%c0_21, %c0_22] : memref<256x128xf32, #tpu.memory_space<vmem>>, vector<256x128xf32>
      %c0_23 = arith.constant 0 : index
      %c0_24 = arith.constant 0 : index
      %51 = arith.index_cast %48 : i32 to index
      %52 = vector.load %arg4[%c0_23, %c0_24, %51] : memref<1x16x128xf32, #tpu.memory_space<vmem>>, vector<1x1x128xf32>
      %53 = vector.shape_cast %52 : vector<1x1x128xf32> to vector<1x128xf32>
      %c0_25 = arith.constant 0 : index
      %c1_26 = arith.constant 1 : index
      %54 = arith.index_cast %48 : i32 to index
      %55 = vector.load %arg4[%c0_25, %c1_26, %54] : memref<1x16x128xf32, #tpu.memory_space<vmem>>, vector<1x1x128xf32>
      %56 = vector.shape_cast %55 : vector<1x1x128xf32> to vector<1x128xf32>
      %c0_27 = arith.constant 0 : index
      %c2 = arith.constant 2 : index
      %57 = arith.index_cast %48 : i32 to index
      %58 = vector.load %arg4[%c0_27, %c2, %57] : memref<1x16x128xf32, #tpu.memory_space<vmem>>, vector<1x1x128xf32>
      %59 = vector.shape_cast %58 : vector<1x1x128xf32> to vector<1x128xf32>
      %c0_28 = arith.constant 0 : index
      %c3 = arith.constant 3 : index
      %60 = arith.index_cast %48 : i32 to index
      %61 = vector.load %arg4[%c0_28, %c3, %60] : memref<1x16x128xf32, #tpu.memory_space<vmem>>, vector<1x1x128xf32>
      %62 = vector.shape_cast %61 : vector<1x1x128xf32> to vector<1x128xf32>
      %63 = vector.broadcast %53 : vector<1x128xf32> to vector<256x128xf32>
      %64 = arith.subf %49, %63 : vector<256x128xf32>
      %65 = vector.broadcast %56 : vector<1x128xf32> to vector<256x128xf32>
      %66 = arith.subf %50, %65 : vector<256x128xf32>
      %67 = vector.broadcast %59 : vector<1x128xf32> to vector<256x128xf32>
      %68 = arith.mulf %67, %66 : vector<256x128xf32>
      %69 = vector.broadcast %62 : vector<1x128xf32> to vector<256x128xf32>
      %70 = arith.mulf %69, %64 : vector<256x128xf32>
      %71 = arith.subf %68, %70 : vector<256x128xf32>
      %c0_29 = arith.constant 0 : index
      %c5 = arith.constant 5 : index
      %72 = arith.index_cast %48 : i32 to index
      %73 = vector.load %arg4[%c0_29, %c5, %72] : memref<1x16x128xf32, #tpu.memory_space<vmem>>, vector<1x1x128xf32>
      %74 = vector.shape_cast %73 : vector<1x1x128xf32> to vector<1x128xf32>
      %c0_30 = arith.constant 0 : index
      %c6 = arith.constant 6 : index
      %75 = arith.index_cast %48 : i32 to index
      %76 = vector.load %arg4[%c0_30, %c6, %75] : memref<1x16x128xf32, #tpu.memory_space<vmem>>, vector<1x1x128xf32>
      %77 = vector.shape_cast %76 : vector<1x1x128xf32> to vector<1x128xf32>
      %c0_31 = arith.constant 0 : index
      %c7 = arith.constant 7 : index
      %78 = arith.index_cast %48 : i32 to index
      %79 = vector.load %arg4[%c0_31, %c7, %78] : memref<1x16x128xf32, #tpu.memory_space<vmem>>, vector<1x1x128xf32>
      %80 = vector.shape_cast %79 : vector<1x1x128xf32> to vector<1x128xf32>
      %c0_32 = arith.constant 0 : index
      %c8 = arith.constant 8 : index
      %81 = arith.index_cast %48 : i32 to index
      %82 = vector.load %arg4[%c0_32, %c8, %81] : memref<1x16x128xf32, #tpu.memory_space<vmem>>, vector<1x1x128xf32>
      %83 = vector.shape_cast %82 : vector<1x1x128xf32> to vector<1x128xf32>
      %84 = vector.broadcast %74 : vector<1x128xf32> to vector<256x128xf32>
      %85 = arith.subf %49, %84 : vector<256x128xf32>
      %86 = vector.broadcast %77 : vector<1x128xf32> to vector<256x128xf32>
      %87 = arith.subf %50, %86 : vector<256x128xf32>
      %88 = vector.broadcast %80 : vector<1x128xf32> to vector<256x128xf32>
      %89 = arith.mulf %88, %87 : vector<256x128xf32>
      %90 = vector.broadcast %83 : vector<1x128xf32> to vector<256x128xf32>
      %91 = arith.mulf %90, %85 : vector<256x128xf32>
      %92 = arith.subf %89, %91 : vector<256x128xf32>
      %93 = arith.minimumf %71, %92 : vector<256x128xf32>
      %94 = arith.maximumf %71, %92 : vector<256x128xf32>
      %c0_33 = arith.constant 0 : index
      %c10 = arith.constant 10 : index
      %95 = arith.index_cast %48 : i32 to index
      %96 = vector.load %arg4[%c0_33, %c10, %95] : memref<1x16x128xf32, #tpu.memory_space<vmem>>, vector<1x1x128xf32>
      %97 = vector.shape_cast %96 : vector<1x1x128xf32> to vector<1x128xf32>
      %c0_34 = arith.constant 0 : index
      %c11 = arith.constant 11 : index
      %98 = arith.index_cast %48 : i32 to index
      %99 = vector.load %arg4[%c0_34, %c11, %98] : memref<1x16x128xf32, #tpu.memory_space<vmem>>, vector<1x1x128xf32>
      %100 = vector.shape_cast %99 : vector<1x1x128xf32> to vector<1x128xf32>
      %c0_35 = arith.constant 0 : index
      %c12 = arith.constant 12 : index
      %101 = arith.index_cast %48 : i32 to index
      %102 = vector.load %arg4[%c0_35, %c12, %101] : memref<1x16x128xf32, #tpu.memory_space<vmem>>, vector<1x1x128xf32>
      %103 = vector.shape_cast %102 : vector<1x1x128xf32> to vector<1x128xf32>
      %c0_36 = arith.constant 0 : index
      %c13 = arith.constant 13 : index
      %104 = arith.index_cast %48 : i32 to index
      %105 = vector.load %arg4[%c0_36, %c13, %104] : memref<1x16x128xf32, #tpu.memory_space<vmem>>, vector<1x1x128xf32>
      %106 = vector.shape_cast %105 : vector<1x1x128xf32> to vector<1x128xf32>
      %107 = vector.broadcast %97 : vector<1x128xf32> to vector<256x128xf32>
      %108 = arith.subf %49, %107 : vector<256x128xf32>
      %109 = vector.broadcast %100 : vector<1x128xf32> to vector<256x128xf32>
      %110 = arith.subf %50, %109 : vector<256x128xf32>
      %111 = vector.broadcast %103 : vector<1x128xf32> to vector<256x128xf32>
      %112 = arith.mulf %111, %110 : vector<256x128xf32>
      %113 = vector.broadcast %106 : vector<1x128xf32> to vector<256x128xf32>
      %114 = arith.mulf %113, %108 : vector<256x128xf32>
      %115 = arith.subf %112, %114 : vector<256x128xf32>
      %116 = arith.minimumf %93, %115 : vector<256x128xf32>
      %117 = arith.maximumf %94, %115 : vector<256x128xf32>
      %cst_37 = arith.constant 0.000000e+00 : f32
      %118 = vector.broadcast %cst_37 : f32 to vector<256x128xf32>
      %119 = arith.cmpf oge, %116, %118 : vector<256x128xf32>
      %cst_38 = arith.constant 0.000000e+00 : f32
      %120 = vector.broadcast %cst_38 : f32 to vector<256x128xf32>
      %121 = arith.cmpf ole, %117, %120 : vector<256x128xf32>
      %122 = arith.ori %119, %121 : vector<256x128xi1>
      %c0_39 = arith.constant 0 : index
      %c0_40 = arith.constant 0 : index
      %123 = vector.load %arg9[%c0_39, %c0_40] : memref<256x128xf32, #tpu.memory_space<vmem>>, vector<256x128xf32>
      %cst_41 = arith.constant 0.000000e+00 : f32
      %124 = vector.broadcast %cst_41 : f32 to vector<256x128xf32>
      %125 = arith.select %122, %124, %123 : vector<256x128xi1>, vector<256x128xf32>
      %c0_42 = arith.constant 0 : index
      %c0_43 = arith.constant 0 : index
      %126 = vector.load %arg9[%c0_42, %c0_43] : memref<256x128xf32, #tpu.memory_space<vmem>>, vector<256x128xf32>
      tpu.vector_store %arg9[%c0_42, %c0_43], %125 {strides = array<i32>} : memref<256x128xf32, #tpu.memory_space<vmem>>, vector<256x128xf32>,
    } else {
    }
    %c1_i32_11 = arith.constant 1 : i32
    %c0_12 = arith.constant 0 : index
    %c0_13 = arith.constant 0 : index
    %26 = vector.load %arg9[%c0_12, %c0_13] : memref<256x128xf32, #tpu.memory_space<vmem>>, vector<256x128xf32>
    %c1_i32_14 = arith.constant 1 : i32
    %27 = tpu.dynamic_rotate %26 by %c1_i32_14 dim 1 : vector<256x128xf32>, i32 -> vector<256x128xf32>
    %28 = arith.mulf %26, %27 : vector<256x128xf32>
    %c2_i32 = arith.constant 2 : i32
    %29 = tpu.dynamic_rotate %28 by %c2_i32 dim 1 : vector<256x128xf32>, i32 -> vector<256x128xf32>
    %30 = arith.mulf %28, %29 : vector<256x128xf32>
    %c4_i32 = arith.constant 4 : i32
    %31 = tpu.dynamic_rotate %30 by %c4_i32 dim 1 : vector<256x128xf32>, i32 -> vector<256x128xf32>
    %32 = arith.mulf %30, %31 : vector<256x128xf32>
    %c8_i32 = arith.constant 8 : i32
    %33 = tpu.dynamic_rotate %32 by %c8_i32 dim 1 : vector<256x128xf32>, i32 -> vector<256x128xf32>
    %34 = arith.mulf %32, %33 : vector<256x128xf32>
    %c16_i32 = arith.constant 16 : i32
    %35 = tpu.dynamic_rotate %34 by %c16_i32 dim 1 : vector<256x128xf32>, i32 -> vector<256x128xf32>
    %36 = arith.mulf %34, %35 : vector<256x128xf32>
    %c32_i32 = arith.constant 32 : i32
    %37 = tpu.dynamic_rotate %36 by %c32_i32 dim 1 : vector<256x128xf32>, i32 -> vector<256x128xf32>
    %38 = arith.mulf %36, %37 : vector<256x128xf32>
    %c64_i32 = arith.constant 64 : i32
    %39 = tpu.dynamic_rotate %38 by %c64_i32 dim 1 : vector<256x128xf32>, i32 -> vector<256x128xf32>
    %40 = arith.mulf %38, %39 : vector<256x128xf32>
    %41 = vector.extract_strided_slice %40 {offsets = [0, 0], sizes = [256, 1], strides = [1, 1]} : vector<256x128xf32> to vector<256x1xf32>
    %cst_15 = arith.constant 1.000000e+00 : f32
    %42 = vector.broadcast %cst_15 : f32 to vector<256x1xf32>
    %43 = arith.subf %42, %41 : vector<256x1xf32>
    %c0_16 = arith.constant 0 : index
    %c0_17 = arith.constant 0 : index
    %c0_18 = arith.constant 0 : index
    %44 = vector.load %arg6[%c0_16, %c0_17, %c0_18] : memref<1x256x1xf32, #tpu.memory_space<vmem>>, vector<1x256x1xf32>
    %45 = vector.shape_cast %44 : vector<1x256x1xf32> to vector<256x1xf32>
    %46 = vector.shape_cast %43 : vector<256x1xf32> to vector<1x256x1xf32>
    tpu.vector_store %arg6[%c0_16, %c0_17, %c0_18], %46 {strides = array<i32>} : memref<1x256x1xf32, #tpu.memory_space<vmem>>, vector<1x256x1xf32>,
    return
  }
  func.func @transform_0(%arg0: i32, %arg1: i32, %arg2: memref<2x2xi32, #tpu.memory_space<smem>>, %arg3: memref<2x1xi32, #tpu.memory_space<smem>>) -> (i32, i32, i32) {
    %c0_i32 = arith.constant 0 : i32
    %c0_i32_0 = arith.constant 0 : i32
    %c0_i32_1 = arith.constant 0 : i32
    return %arg0, %c0_i32, %c0_i32_0 : i32, i32, i32
  }
  func.func @transform_1(%arg0: i32, %arg1: i32, %arg2: memref<2x2xi32, #tpu.memory_space<smem>>, %arg3: memref<2x1xi32, #tpu.memory_space<smem>>) -> (i32, i32) {
    %c0_i32 = arith.constant 0 : i32
    %c0_i32_0 = arith.constant 0 : i32
    return %arg1, %c0_i32 : i32, i32
  }
  func.func @transform_2(%arg0: i32, %arg1: i32, %arg2: memref<2x2xi32, #tpu.memory_space<smem>>, %arg3: memref<2x1xi32, #tpu.memory_space<smem>>) -> (i32, i32, i32) {
    %c0_i32 = arith.constant 0 : i32
    %c0_i32_0 = arith.constant 0 : i32
    return %arg0, %arg1, %c0_i32 : i32, i32, i32
  }
}

</mosaic_0001>

<llo_original>
// kernel: tpu_custom_call.1
$region0: #{tpu_custom_call.1}
  #allocation0 [shape = 'u32[]', space=smem, size = 0x4, offset = 0x4, fixed_abs, tag = 'smem constant byte address 0x4 - core index']
  #allocation1 [shape = 'u32[72,128]{1,0:T(1,128)}', space=vmem, size = 0x9000, scoped, tag = 'internal scratch']
  #allocation2 [shape = 'f32[256,128]{1,0:T(8,128)}', space=vmem, size = 0x20000, scoped, tag = 'scratch operand']
  #allocation3 [shape = 'f32[256,128]{1,0:T(8,128)}', space=vmem, size = 0x20000, scoped, tag = 'scratch operand']
  #allocation4 [shape = 'f32[256,128]{1,0:T(8,128)}', space=vmem, size = 0x20000, scoped, tag = 'scratch operand']
  #allocation5 [shape = 's32[1]{0}', space=sflag, size = 0x4, scoped, tag = 'scoped memory for tpu_custom_call.1']
  #allocation6 [shape = 'u8[1024]{0}', space=smem, size = 0x400, scoped, tag = 'prefetched SMEM operand 0']
  #allocation7 [shape = 'u8[1024]{0}', space=smem, size = 0x400, scoped, tag = 'prefetched SMEM operand 1']
  %s0 = inlined_call_operand.vmem [shape: s32[2,2], index: 0, kind: input, shape index: {}]
  %s1 = inlined_call_operand.vmem [shape: s32[2,1], index: 1, kind: input, shape index: {}]
  %s2 = inlined_call_operand.vmem [shape: f32[2,16,128], index: 2, kind: input, shape index: {}]
  %s3 = inlined_call_operand.vmem [shape: f32[256,2], index: 3, kind: input, shape index: {}]
  %s4 = inlined_call_operand.vmem [shape: f32[2,256,1], index: 4, kind: output, shape index: {}]
  %s5 = sld [smem:[#allocation0]]
  $region45: #{tpu_custom_call.1} parent=0
    _
  %s7 = ssub.s32 1, %s5
  %s8 = scalar_select 0, %s7, %s5
  %s10 = sshll.u32 %s0, 4
  %s11 = int_to_ptr.vmem [resolvable:$true] %s10
  %13 = dma.vmem_to_smem %s11, 32, [#allocation6], [#allocation5]
  %s15 = sshll.u32 %s1, 4
  %s16 = int_to_ptr.vmem [resolvable:$true] %s15
  %18 = dma.vmem_to_smem %s16, 32, [#allocation7], [#allocation5]
  %20 = dma.done [#allocation5], 64
  %21 = sfence
  loop: start=0, step=1, limit=4
  $region2: #{tpu_custom_call.1} parent=0 // loop_pre_header
    _
  $region3: #{tpu_custom_call.1} parent=0 // loop_header
    %s23 = sphi 0, %s27
    %p24 = scmp.ge.s32.totalorder %s23, 4
    %s30 = sphi 0, %s42
    %s31 = sphi 0, %s38
    %s32 = sphi 0, %s30
    %s33 = sphi 0, %s31
    %s34 = sphi 0, %s32
    %s35 = sphi 0, %s33
    %s45 = sphi 0, %s47
    %s48 = sphi 0, %s45
    %s49 = sphi 0, %s48
    %s65 = sphi 0, %s49
    %s71 = sphi 0, %s73
    %s74 = sphi 0, %s71
    %s75 = sphi 0, %s74
    %s91 = sphi 0, %s75
    %s99 = sphi 0, %s101
    %s102 = sphi 0, %s99
    %s103 = sphi 0, %s102
    %s119 = sphi 0, %s103
  $region4: #{tpu_custom_call.1} parent=0 // loop_header_branch
    %26 = sbr.rel (%p24) target = $region8
  $region5: #{tpu_custom_call.1} parent=0 // loop_body
    %s28 = ssub.s32 %s23, 1
    %s29 = ssub.s32 %s23, 2
    %s36 = sadd.s32 1, %s31
    %p37 = scmp.ge.s32.totalorder %s36, 1
    %s38 = scalar_select %p37, 0, %s36
    %s39 = sadd.s32 1, %s30
    %s40 = scalar_select %p37, %s39, %s30
    %p41 = scmp.ge.s32.totalorder %s40, 2
    %s42 = scalar_select %p41, 0, %s40
    %s43 = ssub.s32 %s30, %s42
    %p44 = scmp.eq.s32.totalorder %s43, 0
    %s46 = sadd.s32 %s45, 1
    %s47 = scalar_select %p44, %s45, %s46
    %p50 = pneg %p44
    %p51 = scmp.eq.s32.totalorder %s23, 1
    %p52 = por %p50, %p51
    %p53 = scmp.ne.s32.totalorder %s45, %s48
    %p54 = scmp.eq.s32.totalorder %s23, 0
    %p55 = por %p53, %p54
    %p56 = scmp.ne.s32.totalorder %s45, %s48
    %p57 = scmp.eq.s32.totalorder %s28, 1
    %p58 = por %p56, %p57
    %p59 = scmp.ne.s32.totalorder %s48, %s49
    %p60 = scmp.eq.s32.totalorder %s28, 0
    %p61 = por %p59, %p60
    %p62 = scmp.ne.s32.totalorder %s48, %s49
    %p63 = scmp.eq.s32.totalorder %s29, 1
    %p64 = por %p62, %p63
    %p66 = scmp.ne.s32.totalorder %s49, %s65
    %p67 = scmp.eq.s32.totalorder %s29, 0
    %p68 = por %p66, %p67
    %s69 = ssub.s32 %s31, %s38
    %p70 = scmp.eq.s32.totalorder %s69, 0
    %s72 = sadd.s32 %s71, 1
    %s73 = scalar_select %p70, %s71, %s72
    %p76 = pneg %p70
    %p77 = scmp.eq.s32.totalorder %s23, 1
    %p78 = por %p76, %p77
    %p79 = scmp.ne.s32.totalorder %s71, %s74
    %p80 = scmp.eq.s32.totalorder %s23, 0
    %p81 = por %p79, %p80
    %p82 = scmp.ne.s32.totalorder %s71, %s74
    %p83 = scmp.eq.s32.totalorder %s28, 1
    %p84 = por %p82, %p83
    %p85 = scmp.ne.s32.totalorder %s74, %s75
    %p86 = scmp.eq.s32.totalorder %s28, 0
    %p87 = por %p85, %p86
    %p88 = scmp.ne.s32.totalorder %s74, %s75
    %p89 = scmp.eq.s32.totalorder %s29, 1
    %p90 = por %p88, %p89
    %p92 = scmp.ne.s32.totalorder %s75, %s91
    %p93 = scmp.eq.s32.totalorder %s29, 0
    %p94 = por %p92, %p93
    %s95 = ssub.s32 %s30, %s42
    %s96 = ssub.s32 %s31, %s38
    %s97 = sor.u32 %s95, %s96
    %p98 = scmp.eq.s32.totalorder %s97, 0
    %s100 = sadd.s32 %s99, 1
    %s101 = scalar_select %p98, %s99, %s100
    %p104 = pneg %p98
    %p105 = scmp.eq.s32.totalorder %s23, 1
    %p106 = por %p104, %p105
    %p107 = scmp.ne.s32.totalorder %s99, %s102
    %p108 = scmp.eq.s32.totalorder %s23, 0
    %p109 = por %p107, %p108
    %p110 = scmp.ne.s32.totalorder %s99, %s102
    %p111 = scmp.eq.s32.totalorder %s28, 1
    %p112 = por %p110, %p111
    %p113 = scmp.ne.s32.totalorder %s102, %s103
    %p114 = scmp.eq.s32.totalorder %s28, 0
    %p115 = por %p113, %p114
    %p116 = scmp.ne.s32.totalorder %s102, %s103
    %p117 = scmp.eq.s32.totalorder %s29, 1
    %p118 = por %p116, %p117
    %p120 = scmp.ne.s32.totalorder %s103, %s119
    %p121 = scmp.eq.s32.totalorder %s29, 0
    %p122 = por %p120, %p121
    %p123 = scmp.le.s32.totalorder 1, %s23
    %p124 = scmp.lt.s32.totalorder %s23, 3
    %p125 = pnand %p123, %p124
    %p126 = pneg %p125
    // Predicated region
    $region9: #{tpu_custom_call.1} parent=5 // pred_check
      _
    $region10: #{tpu_custom_call.1} parent=5 // pred_check_branch
      %128 = sbr.rel (%p125) target = $region12
    $region11: #{tpu_custom_call.1} parent=5 // pred_region
      %s129 = ssub.s32 %s23, 1
      // Predicated region
      $region13: #{tpu_custom_call.1} parent=11 // pred_check
        %p130 = pneg %p87
      $region14: #{tpu_custom_call.1} parent=11 // pred_check_branch
        %132 = sbr.rel (%p130) target = $region16
      $region15: #{tpu_custom_call.1} parent=11 // pred_region
        %s133 = smul.u32 32, %s33
        %p134 = scmp.lt.s32.totalorder %s133, 31
        %s135 = scalar_select %p134, %s133, 31
        %s136 = smul.addr %s135, 8
        %s137 = scalar_lea.vmem %s3, %s136
        %s138 = smul.u32 32, %s33
      $region16: #{tpu_custom_call.1} parent=11 // pred_fallthru
        _
    $region12: #{tpu_custom_call.1} parent=5 // pred_fallthru
      _
    %p139 = scmp.lt.s32.totalorder %s23, 2
    // Predicated region
    $region17: #{tpu_custom_call.1} parent=5 // pred_check
      %p140 = pneg %p139
    $region18: #{tpu_custom_call.1} parent=5 // pred_check_branch
      %142 = sbr.rel (%p140) target = $region20
    $region19: #{tpu_custom_call.1} parent=5 // pred_region
      // Predicated region
      $region21: #{tpu_custom_call.1} parent=19 // pred_check
        %p143 = pneg %p55
      $region22: #{tpu_custom_call.1} parent=19 // pred_check_branch
        %145 = sbr.rel (%p143) target = $region24
      $region23: #{tpu_custom_call.1} parent=19 // pred_region
        %p146 = scmp.lt.s32.totalorder %s30, 1
        %s147 = scalar_select %p146, %s30, 1
        %s148 = smul.addr %s147, 2
        %s149 = smul.addr %s148, 8
        %s150 = scalar_lea.vmem %s2, %s149
      $region24: #{tpu_custom_call.1} parent=19 // pred_fallthru
        _
    $region20: #{tpu_custom_call.1} parent=5 // pred_fallthru
      _
    %p151 = scmp.le.s32.totalorder 1, %s23
    %p152 = scmp.lt.s32.totalorder %s23, 3
    %p153 = pnand %p151, %p152
    %p154 = pneg %p153
    // Predicated region
    $region25: #{tpu_custom_call.1} parent=5 // pred_check
      _
    $region26: #{tpu_custom_call.1} parent=5 // pred_check_branch
      %156 = sbr.rel (%p153) target = $region28
    $region27: #{tpu_custom_call.1} parent=5 // pred_region
      %s157 = ssub.s32 %s23, 1
      %p158 = scmp.lt.s32.totalorder %s32, 1
      %s159 = scalar_select %p158, %s32, 1
      %s160 = smul.addr %s159, 2
      %s161 = smul.addr %s160, 8
      %s162 = scalar_lea.vmem %s2, %s161
      %p163 = pneg %p61
      %p164 = pneg %p58
      %s165 = smul.u32 32, %s33
      %p166 = scmp.lt.s32.totalorder %s165, 31
      %s167 = scalar_select %p166, %s165, 31
      %s168 = smul.addr %s167, 8
      %s169 = scalar_lea.vmem %s3, %s168
      %p170 = pneg %p87
      %p171 = pneg %p84
      %p172 = pneg %p115
      %p173 = pneg %p112
      %s174 = smul.u32 32, %s33
      %p175 = scmp.lt.s32.totalorder %s32, 1
      %s176 = scalar_select %p175, %s32, 1
      %p177 = scmp.lt.s32.totalorder %s174, 31
      %s178 = scalar_select %p177, %s174, 31
      %s179 = smul.addr %s176, 32
      %s180 = sadd.s32 %s178, %s179
      %s181 = smul.addr %s180, 8
      %s182 = scalar_lea.vmem %s4, %s181
      %p183 = scmp.lt.s32.totalorder %s32, 1
      %s184 = scalar_select %p183, %s32, 1
      %s185 = smul.addr %s184, 2
      %s186 = smul.addr %s185, 8
      %s187 = scalar_lea.vmem %s2, %s186
      %s188 = smul.u32 32, %s33
      %p189 = scmp.lt.s32.totalorder %s188, 31
      %s190 = scalar_select %p189, %s188, 31
      %s191 = smul.addr %s190, 8
      %s192 = scalar_lea.vmem %s3, %s191
      %s193 = smul.u32 32, %s33
      %s194 = smul.u32 32, %s33
      %p195 = scmp.lt.s32.totalorder %s32, 1
      %s196 = scalar_select %p195, %s32, 1
      %p197 = scmp.lt.s32.totalorder %s194, 31
      %s198 = scalar_select %p197, %s194, 31
      %s199 = smul.addr %s196, 32
      %s200 = sadd.s32 %s198, %s199
      %s201 = smul.addr %s200, 8
      %s202 = scalar_lea.vmem %s4, %s201
      %s203 = smul.u32 32, %s33
      %v204 = vld [vmem:[%s192] sm:$0xff]
      %v205 = vld [vmem:[%s192 + $0x8] sm:$0xff]
      %v206 = vld [vmem:[%s192 + $0x10] sm:$0xff]
      %v207 = vld [vmem:[%s192 + $0x18] sm:$0xff]
      %v208 = vld [vmem:[%s192 + $0x20] sm:$0xff]
      %v209 = vld [vmem:[%s192 + $0x28] sm:$0xff]
      %v210 = vld [vmem:[%s192 + $0x30] sm:$0xff]
      %v211 = vld [vmem:[%s192 + $0x38] sm:$0xff]
      %v212 = vld [vmem:[%s192 + $0x40] sm:$0xff]
      %v213 = vld [vmem:[%s192 + $0x48] sm:$0xff]
      %v214 = vld [vmem:[%s192 + $0x50] sm:$0xff]
      %v215 = vld [vmem:[%s192 + $0x58] sm:$0xff]
      %v216 = vld [vmem:[%s192 + $0x60] sm:$0xff]
      %v217 = vld [vmem:[%s192 + $0x68] sm:$0xff]
      %v218 = vld [vmem:[%s192 + $0x70] sm:$0xff]
      %v219 = vld [vmem:[%s192 + $0x78] sm:$0xff]
      %v220 = vld [vmem:[%s192 + $0x80] sm:$0xff]
      %v221 = vld [vmem:[%s192 + $0x88] sm:$0xff]
      %v222 = vld [vmem:[%s192 + $0x90] sm:$0xff]
      %v223 = vld [vmem:[%s192 + $0x98] sm:$0xff]
      %v224 = vld [vmem:[%s192 + $0xa0] sm:$0xff]
      %v225 = vld [vmem:[%s192 + $0xa8] sm:$0xff]
      %v226 = vld [vmem:[%s192 + $0xb0] sm:$0xff]
      %v227 = vld [vmem:[%s192 + $0xb8] sm:$0xff]
      %v228 = vld [vmem:[%s192 + $0xc0] sm:$0xff]
      %v229 = vld [vmem:[%s192 + $0xc8] sm:$0xff]
      %v230 = vld [vmem:[%s192 + $0xd0] sm:$0xff]
      %v231 = vld [vmem:[%s192 + $0xd8] sm:$0xff]
      %v232 = vld [vmem:[%s192 + $0xe0] sm:$0xff]
      %v233 = vld [vmem:[%s192 + $0xe8] sm:$0xff]
      %v234 = vld [vmem:[%s192 + $0xf0] sm:$0xff]
      %v235 = vld [vmem:[%s192 + $0xf8] sm:$0xff]
      %237 = vset.pattern.permute.xlu0 0
      %238 = vperm.xlu0 %237, %v204
      %v239 = vpop.permute.xlu0 %238
      %242 = vset.pattern.permute.xlu0 0
      %243 = vperm.xlu0 %242, %v205
      %v244 = vpop.permute.xlu0 %243
      %247 = vset.pattern.permute.xlu0 0
      %248 = vperm.xlu0 %247, %v206
      %v249 = vpop.permute.xlu0 %248
      %252 = vset.pattern.permute.xlu0 0
      %253 = vperm.xlu0 %252, %v207
      %v254 = vpop.permute.xlu0 %253
      %257 = vset.pattern.permute.xlu0 0
      %258 = vperm.xlu0 %257, %v208
      %v259 = vpop.permute.xlu0 %258
      %262 = vset.pattern.permute.xlu0 0
      %263 = vperm.xlu0 %262, %v209
      %v264 = vpop.permute.xlu0 %263
      %267 = vset.pattern.permute.xlu0 0
      %268 = vperm.xlu0 %267, %v210
      %v269 = vpop.permute.xlu0 %268
      %272 = vset.pattern.permute.xlu0 0
      %273 = vperm.xlu0 %272, %v211
      %v274 = vpop.permute.xlu0 %273
      %277 = vset.pattern.permute.xlu0 0
      %278 = vperm.xlu0 %277, %v212
      %v279 = vpop.permute.xlu0 %278
      %282 = vset.pattern.permute.xlu0 0
      %283 = vperm.xlu0 %282, %v213
      %v284 = vpop.permute.xlu0 %283
      %287 = vset.pattern.permute.xlu0 0
      %288 = vperm.xlu0 %287, %v214
      %v289 = vpop.permute.xlu0 %288
      %292 = vset.pattern.permute.xlu0 0
      %293 = vperm.xlu0 %292, %v215
      %v294 = vpop.permute.xlu0 %293
      %297 = vset.pattern.permute.xlu0 0
      %298 = vperm.xlu0 %297, %v216
      %v299 = vpop.permute.xlu0 %298
      %302 = vset.pattern.permute.xlu0 0
      %303 = vperm.xlu0 %302, %v217
      %v304 = vpop.permute.xlu0 %303
      %307 = vset.pattern.permute.xlu0 0
      %308 = vperm.xlu0 %307, %v218
      %v309 = vpop.permute.xlu0 %308
      %312 = vset.pattern.permute.xlu0 0
      %313 = vperm.xlu0 %312, %v219
      %v314 = vpop.permute.xlu0 %313
      %317 = vset.pattern.permute.xlu0 0
      %318 = vperm.xlu0 %317, %v220
      %v319 = vpop.permute.xlu0 %318
      %322 = vset.pattern.permute.xlu0 0
      %323 = vperm.xlu0 %322, %v221
      %v324 = vpop.permute.xlu0 %323
      %327 = vset.pattern.permute.xlu0 0
      %328 = vperm.xlu0 %327, %v222
      %v329 = vpop.permute.xlu0 %328
      %332 = vset.pattern.permute.xlu0 0
      %333 = vperm.xlu0 %332, %v223
      %v334 = vpop.permute.xlu0 %333
      %337 = vset.pattern.permute.xlu0 0
      %338 = vperm.xlu0 %337, %v224
      %v339 = vpop.permute.xlu0 %338
      %342 = vset.pattern.permute.xlu0 0
      %343 = vperm.xlu0 %342, %v225
      %v344 = vpop.permute.xlu0 %343
      %347 = vset.pattern.permute.xlu0 0
      %348 = vperm.xlu0 %347, %v226
      %v349 = vpop.permute.xlu0 %348
      %352 = vset.pattern.permute.xlu0 0
      %353 = vperm.xlu0 %352, %v227
      %v354 = vpop.permute.xlu0 %353
      %357 = vset.pattern.permute.xlu0 0
      %358 = vperm.xlu0 %357, %v228
      %v359 = vpop.permute.xlu0 %358
      %362 = vset.pattern.permute.xlu0 0
      %363 = vperm.xlu0 %362, %v229
      %v364 = vpop.permute.xlu0 %363
      %367 = vset.pattern.permute.xlu0 0
      %368 = vperm.xlu0 %367, %v230
      %v369 = vpop.permute.xlu0 %368
      %372 = vset.pattern.permute.xlu0 0
      %373 = vperm.xlu0 %372, %v231
      %v374 = vpop.permute.xlu0 %373
      %377 = vset.pattern.permute.xlu0 0
      %378 = vperm.xlu0 %377, %v232
      %v379 = vpop.permute.xlu0 %378
      %382 = vset.pattern.permute.xlu0 0
      %383 = vperm.xlu0 %382, %v233
      %v384 = vpop.permute.xlu0 %383
      %387 = vset.pattern.permute.xlu0 0
      %388 = vperm.xlu0 %387, %v234
      %v389 = vpop.permute.xlu0 %388
      %392 = vset.pattern.permute.xlu0 0
      %393 = vperm.xlu0 %392, %v235
      %v394 = vpop.permute.xlu0 %393
      %396 = vst [vmem:[#allocation2] sm:$0xff] %v239
      %397 = vst [vmem:[#allocation2 + $0x8] sm:$0xff] %v244
      %398 = vst [vmem:[#allocation2 + $0x10] sm:$0xff] %v249
      %399 = vst [vmem:[#allocation2 + $0x18] sm:$0xff] %v254
      %400 = vst [vmem:[#allocation2 + $0x20] sm:$0xff] %v259
      %401 = vst [vmem:[#allocation2 + $0x28] sm:$0xff] %v264
      %402 = vst [vmem:[#allocation2 + $0x30] sm:$0xff] %v269
      %403 = vst [vmem:[#allocation2 + $0x38] sm:$0xff] %v274
      %404 = vst [vmem:[#allocation2 + $0x40] sm:$0xff] %v279
      %405 = vst [vmem:[#allocation2 + $0x48] sm:$0xff] %v284
      %406 = vst [vmem:[#allocation2 + $0x50] sm:$0xff] %v289
      %407 = vst [vmem:[#allocation2 + $0x58] sm:$0xff] %v294
      %408 = vst [vmem:[#allocation2 + $0x60] sm:$0xff] %v299
      %409 = vst [vmem:[#allocation2 + $0x68] sm:$0xff] %v304
      %410 = vst [vmem:[#allocation2 + $0x70] sm:$0xff] %v309
      %411 = vst [vmem:[#allocation2 + $0x78] sm:$0xff] %v314
      %412 = vst [vmem:[#allocation2 + $0x80] sm:$0xff] %v319
      %413 = vst [vmem:[#allocation2 + $0x88] sm:$0xff] %v324
      %414 = vst [vmem:[#allocation2 + $0x90] sm:$0xff] %v329
      %415 = vst [vmem:[#allocation2 + $0x98] sm:$0xff] %v334
      %416 = vst [vmem:[#allocation2 + $0xa0] sm:$0xff] %v339
      %417 = vst [vmem:[#allocation2 + $0xa8] sm:$0xff] %v344
      %418 = vst [vmem:[#allocation2 + $0xb0] sm:$0xff] %v349
      %419 = vst [vmem:[#allocation2 + $0xb8] sm:$0xff] %v354
      %420 = vst [vmem:[#allocation2 + $0xc0] sm:$0xff] %v359
      %421 = vst [vmem:[#allocation2 + $0xc8] sm:$0xff] %v364
      %422 = vst [vmem:[#allocation2 + $0xd0] sm:$0xff] %v369
      %423 = vst [vmem:[#allocation2 + $0xd8] sm:$0xff] %v374
      %424 = vst [vmem:[#allocation2 + $0xe0] sm:$0xff] %v379
      %425 = vst [vmem:[#allocation2 + $0xe8] sm:$0xff] %v384
      %426 = vst [vmem:[#allocation2 + $0xf0] sm:$0xff] %v389
      %427 = vst [vmem:[#allocation2 + $0xf8] sm:$0xff] %v394
      %v428 = vld [vmem:[%s192] sm:$0xff]
      %v429 = vld [vmem:[%s192 + $0x8] sm:$0xff]
      %v430 = vld [vmem:[%s192 + $0x10] sm:$0xff]
      %v431 = vld [vmem:[%s192 + $0x18] sm:$0xff]
      %v432 = vld [vmem:[%s192 + $0x20] sm:$0xff]
      %v433 = vld [vmem:[%s192 + $0x28] sm:$0xff]
      %v434 = vld [vmem:[%s192 + $0x30] sm:$0xff]
      %v435 = vld [vmem:[%s192 + $0x38] sm:$0xff]
      %v436 = vld [vmem:[%s192 + $0x40] sm:$0xff]
      %v437 = vld [vmem:[%s192 + $0x48] sm:$0xff]
      %v438 = vld [vmem:[%s192 + $0x50] sm:$0xff]
      %v439 = vld [vmem:[%s192 + $0x58] sm:$0xff]
      %v440 = vld [vmem:[%s192 + $0x60] sm:$0xff]
      %v441 = vld [vmem:[%s192 + $0x68] sm:$0xff]
      %v442 = vld [vmem:[%s192 + $0x70] sm:$0xff]
      %v443 = vld [vmem:[%s192 + $0x78] sm:$0xff]
      %v444 = vld [vmem:[%s192 + $0x80] sm:$0xff]
      %v445 = vld [vmem:[%s192 + $0x88] sm:$0xff]
      %v446 = vld [vmem:[%s192 + $0x90] sm:$0xff]
      %v447 = vld [vmem:[%s192 + $0x98] sm:$0xff]
      %v448 = vld [vmem:[%s192 + $0xa0] sm:$0xff]
      %v449 = vld [vmem:[%s192 + $0xa8] sm:$0xff]
      %v450 = vld [vmem:[%s192 + $0xb0] sm:$0xff]
      %v451 = vld [vmem:[%s192 + $0xb8] sm:$0xff]
      %v452 = vld [vmem:[%s192 + $0xc0] sm:$0xff]
      %v453 = vld [vmem:[%s192 + $0xc8] sm:$0xff]
      %v454 = vld [vmem:[%s192 + $0xd0] sm:$0xff]
      %v455 = vld [vmem:[%s192 + $0xd8] sm:$0xff]
      %v456 = vld [vmem:[%s192 + $0xe0] sm:$0xff]
      %v457 = vld [vmem:[%s192 + $0xe8] sm:$0xff]
      %v458 = vld [vmem:[%s192 + $0xf0] sm:$0xff]
      %v459 = vld [vmem:[%s192 + $0xf8] sm:$0xff]
      %461 = vset.pattern.permute.xlu0 1
      %462 = vperm.xlu0 %461, %v428
      %v463 = vpop.permute.xlu0 %462
      %466 = vset.pattern.permute.xlu0 1
      %467 = vperm.xlu0 %466, %v429
      %v468 = vpop.permute.xlu0 %467
      %471 = vset.pattern.permute.xlu0 1
      %472 = vperm.xlu0 %471, %v430
      %v473 = vpop.permute.xlu0 %472
      %476 = vset.pattern.permute.xlu0 1
      %477 = vperm.xlu0 %476, %v431
      %v478 = vpop.permute.xlu0 %477
      %481 = vset.pattern.permute.xlu0 1
      %482 = vperm.xlu0 %481, %v432
      %v483 = vpop.permute.xlu0 %482
      %486 = vset.pattern.permute.xlu0 1
      %487 = vperm.xlu0 %486, %v433
      %v488 = vpop.permute.xlu0 %487
      %491 = vset.pattern.permute.xlu0 1
      %492 = vperm.xlu0 %491, %v434
      %v493 = vpop.permute.xlu0 %492
      %496 = vset.pattern.permute.xlu0 1
      %497 = vperm.xlu0 %496, %v435
      %v498 = vpop.permute.xlu0 %497
      %501 = vset.pattern.permute.xlu0 1
      %502 = vperm.xlu0 %501, %v436
      %v503 = vpop.permute.xlu0 %502
      %506 = vset.pattern.permute.xlu0 1
      %507 = vperm.xlu0 %506, %v437
      %v508 = vpop.permute.xlu0 %507
      %511 = vset.pattern.permute.xlu0 1
      %512 = vperm.xlu0 %511, %v438
      %v513 = vpop.permute.xlu0 %512
      %516 = vset.pattern.permute.xlu0 1
      %517 = vperm.xlu0 %516, %v439
      %v518 = vpop.permute.xlu0 %517
      %521 = vset.pattern.permute.xlu0 1
      %522 = vperm.xlu0 %521, %v440
      %v523 = vpop.permute.xlu0 %522
      %526 = vset.pattern.permute.xlu0 1
      %527 = vperm.xlu0 %526, %v441
      %v528 = vpop.permute.xlu0 %527
      %531 = vset.pattern.permute.xlu0 1
      %532 = vperm.xlu0 %531, %v442
      %v533 = vpop.permute.xlu0 %532
      %536 = vset.pattern.permute.xlu0 1
      %537 = vperm.xlu0 %536, %v443
      %v538 = vpop.permute.xlu0 %537
      %541 = vset.pattern.permute.xlu0 1
      %542 = vperm.xlu0 %541, %v444
      %v543 = vpop.permute.xlu0 %542
      %546 = vset.pattern.permute.xlu0 1
      %547 = vperm.xlu0 %546, %v445
      %v548 = vpop.permute.xlu0 %547
      %551 = vset.pattern.permute.xlu0 1
      %552 = vperm.xlu0 %551, %v446
      %v553 = vpop.permute.xlu0 %552
      %556 = vset.pattern.permute.xlu0 1
      %557 = vperm.xlu0 %556, %v447
      %v558 = vpop.permute.xlu0 %557
      %561 = vset.pattern.permute.xlu0 1
      %562 = vperm.xlu0 %561, %v448
      %v563 = vpop.permute.xlu0 %562
      %566 = vset.pattern.permute.xlu0 1
      %567 = vperm.xlu0 %566, %v449
      %v568 = vpop.permute.xlu0 %567
      %571 = vset.pattern.permute.xlu0 1
      %572 = vperm.xlu0 %571, %v450
      %v573 = vpop.permute.xlu0 %572
      %576 = vset.pattern.permute.xlu0 1
      %577 = vperm.xlu0 %576, %v451
      %v578 = vpop.permute.xlu0 %577
      %581 = vset.pattern.permute.xlu0 1
      %582 = vperm.xlu0 %581, %v452
      %v583 = vpop.permute.xlu0 %582
      %586 = vset.pattern.permute.xlu0 1
      %587 = vperm.xlu0 %586, %v453
      %v588 = vpop.permute.xlu0 %587
      %591 = vset.pattern.permute.xlu0 1
      %592 = vperm.xlu0 %591, %v454
      %v593 = vpop.permute.xlu0 %592
      %596 = vset.pattern.permute.xlu0 1
      %597 = vperm.xlu0 %596, %v455
      %v598 = vpop.permute.xlu0 %597
      %601 = vset.pattern.permute.xlu0 1
      %602 = vperm.xlu0 %601, %v456
      %v603 = vpop.permute.xlu0 %602
      %606 = vset.pattern.permute.xlu0 1
      %607 = vperm.xlu0 %606, %v457
      %v608 = vpop.permute.xlu0 %607
      %611 = vset.pattern.permute.xlu0 1
      %612 = vperm.xlu0 %611, %v458
      %v613 = vpop.permute.xlu0 %612
      %616 = vset.pattern.permute.xlu0 1
      %617 = vperm.xlu0 %616, %v459
      %v618 = vpop.permute.xlu0 %617
      %620 = vst [vmem:[#allocation3] sm:$0xff] %v463
      %621 = vst [vmem:[#allocation3 + $0x8] sm:$0xff] %v468
      %622 = vst [vmem:[#allocation3 + $0x10] sm:$0xff] %v473
      %623 = vst [vmem:[#allocation3 + $0x18] sm:$0xff] %v478
      %624 = vst [vmem:[#allocation3 + $0x20] sm:$0xff] %v483
      %625 = vst [vmem:[#allocation3 + $0x28] sm:$0xff] %v488
      %626 = vst [vmem:[#allocation3 + $0x30] sm:$0xff] %v493
      %627 = vst [vmem:[#allocation3 + $0x38] sm:$0xff] %v498
      %628 = vst [vmem:[#allocation3 + $0x40] sm:$0xff] %v503
      %629 = vst [vmem:[#allocation3 + $0x48] sm:$0xff] %v508
      %630 = vst [vmem:[#allocation3 + $0x50] sm:$0xff] %v513
      %631 = vst [vmem:[#allocation3 + $0x58] sm:$0xff] %v518
      %632 = vst [vmem:[#allocation3 + $0x60] sm:$0xff] %v523
      %633 = vst [vmem:[#allocation3 + $0x68] sm:$0xff] %v528
      %634 = vst [vmem:[#allocation3 + $0x70] sm:$0xff] %v533
      %635 = vst [vmem:[#allocation3 + $0x78] sm:$0xff] %v538
      %636 = vst [vmem:[#allocation3 + $0x80] sm:$0xff] %v543
      %637 = vst [vmem:[#allocation3 + $0x88] sm:$0xff] %v548
      %638 = vst [vmem:[#allocation3 + $0x90] sm:$0xff] %v553
      %639 = vst [vmem:[#allocation3 + $0x98] sm:$0xff] %v558
      %640 = vst [vmem:[#allocation3 + $0xa0] sm:$0xff] %v563
      %641 = vst [vmem:[#allocation3 + $0xa8] sm:$0xff] %v568
      %642 = vst [vmem:[#allocation3 + $0xb0] sm:$0xff] %v573
      %643 = vst [vmem:[#allocation3 + $0xb8] sm:$0xff] %v578
      %644 = vst [vmem:[#allocation3 + $0xc0] sm:$0xff] %v583
      %645 = vst [vmem:[#allocation3 + $0xc8] sm:$0xff] %v588
      %646 = vst [vmem:[#allocation3 + $0xd0] sm:$0xff] %v593
      %647 = vst [vmem:[#allocation3 + $0xd8] sm:$0xff] %v598
      %648 = vst [vmem:[#allocation3 + $0xe0] sm:$0xff] %v603
      %649 = vst [vmem:[#allocation3 + $0xe8] sm:$0xff] %v608
      %650 = vst [vmem:[#allocation3 + $0xf0] sm:$0xff] %v613
      %651 = vst [vmem:[#allocation3 + $0xf8] sm:$0xff] %v618
      %652 = vst [vmem:[#allocation4] sm:$0xff] 1.0
      %653 = vst [vmem:[#allocation4 + $0x8] sm:$0xff] 1.0
      %654 = vst [vmem:[#allocation4 + $0x10] sm:$0xff] 1.0
      %655 = vst [vmem:[#allocation4 + $0x18] sm:$0xff] 1.0
      %656 = vst [vmem:[#allocation4 + $0x20] sm:$0xff] 1.0
      %657 = vst [vmem:[#allocation4 + $0x28] sm:$0xff] 1.0
      %658 = vst [vmem:[#allocation4 + $0x30] sm:$0xff] 1.0
      %659 = vst [vmem:[#allocation4 + $0x38] sm:$0xff] 1.0
      %660 = vst [vmem:[#allocation4 + $0x40] sm:$0xff] 1.0
      %661 = vst [vmem:[#allocation4 + $0x48] sm:$0xff] 1.0
      %662 = vst [vmem:[#allocation4 + $0x50] sm:$0xff] 1.0
      %663 = vst [vmem:[#allocation4 + $0x58] sm:$0xff] 1.0
      %664 = vst [vmem:[#allocation4 + $0x60] sm:$0xff] 1.0
      %665 = vst [vmem:[#allocation4 + $0x68] sm:$0xff] 1.0
      %666 = vst [vmem:[#allocation4 + $0x70] sm:$0xff] 1.0
      %667 = vst [vmem:[#allocation4 + $0x78] sm:$0xff] 1.0
      %668 = vst [vmem:[#allocation4 + $0x80] sm:$0xff] 1.0
      %669 = vst [vmem:[#allocation4 + $0x88] sm:$0xff] 1.0
      %670 = vst [vmem:[#allocation4 + $0x90] sm:$0xff] 1.0
      %671 = vst [vmem:[#allocation4 + $0x98] sm:$0xff] 1.0
      %672 = vst [vmem:[#allocation4 + $0xa0] sm:$0xff] 1.0
      %673 = vst [vmem:[#allocation4 + $0xa8] sm:$0xff] 1.0
      %674 = vst [vmem:[#allocation4 + $0xb0] sm:$0xff] 1.0
      %675 = vst [vmem:[#allocation4 + $0xb8] sm:$0xff] 1.0
      %676 = vst [vmem:[#allocation4 + $0xc0] sm:$0xff] 1.0
      %677 = vst [vmem:[#allocation4 + $0xc8] sm:$0xff] 1.0
      %678 = vst [vmem:[#allocation4 + $0xd0] sm:$0xff] 1.0
      %679 = vst [vmem:[#allocation4 + $0xd8] sm:$0xff] 1.0
      %680 = vst [vmem:[#allocation4 + $0xe0] sm:$0xff] 1.0
      %681 = vst [vmem:[#allocation4 + $0xe8] sm:$0xff] 1.0
      %682 = vst [vmem:[#allocation4 + $0xf0] sm:$0xff] 1.0
      %683 = vst [vmem:[#allocation4 + $0xf8] sm:$0xff] 1.0
      %s684 = sld [smem:[#allocation7 + %s33]]
      %s685 = sshra.s32 %s33, 7
      %s686 = sand.u32 %s33, 127
      %s687 = sadd.s32 %s685, 1
      %s688 = smul.u32 %s687, 128
      %s689 = sshra.s32 %s33, 7
      %s690 = sand.u32 %s33, 127
      %s691 = sadd.s32 %s688, %s690
      %s692 = sld [smem:[#allocation7 + %s691]]
      %s693 = smul.u32 %s32, 128
      %s694 = sld [smem:[#allocation6 + %s693]]
      %s695 = sadd.s32 %s693, 1
      %s696 = sld [smem:[#allocation6 + %s695]]
      %p697 = scmp.le.s32.totalorder %s694, %s692
      %p698 = scmp.ge.s32.totalorder %s696, %s684
      %p699 = pnand %p697, %p698
      %p700 = pneg %p699
      // Predicated region
      $region29: #{tpu_custom_call.1} parent=27 // pred_check
        _
      $region30: #{tpu_custom_call.1} parent=27 // pred_check_branch
        %702 = sbr.rel (%p699) target = $region32
      $region31: #{tpu_custom_call.1} parent=27 // pred_region
        %v703 = vld [vmem:[#allocation2] sm:$0xff]
        %v704 = vld [vmem:[#allocation2 + $0x8] sm:$0xff]
        %v705 = vld [vmem:[#allocation2 + $0x10] sm:$0xff]
        %v706 = vld [vmem:[#allocation2 + $0x18] sm:$0xff]
        %v707 = vld [vmem:[#allocation2 + $0x20] sm:$0xff]
        %v708 = vld [vmem:[#allocation2 + $0x28] sm:$0xff]
        %v709 = vld [vmem:[#allocation2 + $0x30] sm:$0xff]
        %v710 = vld [vmem:[#allocation2 + $0x38] sm:$0xff]
        %v711 = vld [vmem:[#allocation2 + $0x40] sm:$0xff]
        %v712 = vld [vmem:[#allocation2 + $0x48] sm:$0xff]
        %v713 = vld [vmem:[#allocation2 + $0x50] sm:$0xff]
        %v714 = vld [vmem:[#allocation2 + $0x58] sm:$0xff]
        %v715 = vld [vmem:[#allocation2 + $0x60] sm:$0xff]
        %v716 = vld [vmem:[#allocation2 + $0x68] sm:$0xff]
        %v717 = vld [vmem:[#allocation2 + $0x70] sm:$0xff]
        %v718 = vld [vmem:[#allocation2 + $0x78] sm:$0xff]
        %v719 = vld [vmem:[#allocation2 + $0x80] sm:$0xff]
        %v720 = vld [vmem:[#allocation2 + $0x88] sm:$0xff]
        %v721 = vld [vmem:[#allocation2 + $0x90] sm:$0xff]
        %v722 = vld [vmem:[#allocation2 + $0x98] sm:$0xff]
        %v723 = vld [vmem:[#allocation2 + $0xa0] sm:$0xff]
        %v724 = vld [vmem:[#allocation2 + $0xa8] sm:$0xff]
        %v725 = vld [vmem:[#allocation2 + $0xb0] sm:$0xff]
        %v726 = vld [vmem:[#allocation2 + $0xb8] sm:$0xff]
        %v727 = vld [vmem:[#allocation2 + $0xc0] sm:$0xff]
        %v728 = vld [vmem:[#allocation2 + $0xc8] sm:$0xff]
        %v729 = vld [vmem:[#allocation2 + $0xd0] sm:$0xff]
        %v730 = vld [vmem:[#allocation2 + $0xd8] sm:$0xff]
        %v731 = vld [vmem:[#allocation2 + $0xe0] sm:$0xff]
        %v732 = vld [vmem:[#allocation2 + $0xe8] sm:$0xff]
        %v733 = vld [vmem:[#allocation2 + $0xf0] sm:$0xff]
        %v734 = vld [vmem:[#allocation2 + $0xf8] sm:$0xff]
        %v735 = vld [vmem:[#allocation3] sm:$0xff]
        %v736 = vld [vmem:[#allocation3 + $0x8] sm:$0xff]
        %v737 = vld [vmem:[#allocation3 + $0x10] sm:$0xff]
        %v738 = vld [vmem:[#allocation3 + $0x18] sm:$0xff]
        %v739 = vld [vmem:[#allocation3 + $0x20] sm:$0xff]
        %v740 = vld [vmem:[#allocation3 + $0x28] sm:$0xff]
        %v741 = vld [vmem:[#allocation3 + $0x30] sm:$0xff]
        %v742 = vld [vmem:[#allocation3 + $0x38] sm:$0xff]
        %v743 = vld [vmem:[#allocation3 + $0x40] sm:$0xff]
        %v744 = vld [vmem:[#allocation3 + $0x48] sm:$0xff]
        %v745 = vld [vmem:[#allocation3 + $0x50] sm:$0xff]
        %v746 = vld [vmem:[#allocation3 + $0x58] sm:$0xff]
        %v747 = vld [vmem:[#allocation3 + $0x60] sm:$0xff]
        %v748 = vld [vmem:[#allocation3 + $0x68] sm:$0xff]
        %v749 = vld [vmem:[#allocation3 + $0x70] sm:$0xff]
        %v750 = vld [vmem:[#allocation3 + $0x78] sm:$0xff]
        %v751 = vld [vmem:[#allocation3 + $0x80] sm:$0xff]
        %v752 = vld [vmem:[#allocation3 + $0x88] sm:$0xff]
        %v753 = vld [vmem:[#allocation3 + $0x90] sm:$0xff]
        %v754 = vld [vmem:[#allocation3 + $0x98] sm:$0xff]
        %v755 = vld [vmem:[#allocation3 + $0xa0] sm:$0xff]
        %v756 = vld [vmem:[#allocation3 + $0xa8] sm:$0xff]
        %v757 = vld [vmem:[#allocation3 + $0xb0] sm:$0xff]
        %v758 = vld [vmem:[#allocation3 + $0xb8] sm:$0xff]
        %v759 = vld [vmem:[#allocation3 + $0xc0] sm:$0xff]
        %v760 = vld [vmem:[#allocation3 + $0xc8] sm:$0xff]
        %v761 = vld [vmem:[#allocation3 + $0xd0] sm:$0xff]
        %v762 = vld [vmem:[#allocation3 + $0xd8] sm:$0xff]
        %v763 = vld [vmem:[#allocation3 + $0xe0] sm:$0xff]
        %v764 = vld [vmem:[#allocation3 + $0xe8] sm:$0xff]
        %v765 = vld [vmem:[#allocation3 + $0xf0] sm:$0xff]
        %v766 = vld [vmem:[#allocation3 + $0xf8] sm:$0xff]
        %v767 = vld [vmem:[%s187] sm:$0x1]
        %v768 = vld [vmem:[%s187 + $0x1] sm:$0x1]
        %v769 = vld [vmem:[%s187 + $0x2] sm:$0x1]
        %v770 = vld [vmem:[%s187 + $0x3] sm:$0x1]
        %v771 = vperm.slane %v767, 0
        %v772 = vsub.f32 %v703, %v771
        %v773 = vsub.f32 %v704, %v771
        %v774 = vsub.f32 %v705, %v771
        %v775 = vsub.f32 %v706, %v771
        %v776 = vsub.f32 %v707, %v771
        %v777 = vsub.f32 %v708, %v771
        %v778 = vsub.f32 %v709, %v771
        %v779 = vsub.f32 %v710, %v771
        %v780 = vsub.f32 %v711, %v771
        %v781 = vsub.f32 %v712, %v771
        %v782 = vsub.f32 %v713, %v771
        %v783 = vsub.f32 %v714, %v771
        %v784 = vsub.f32 %v715, %v771
        %v785 = vsub.f32 %v716, %v771
        %v786 = vsub.f32 %v717, %v771
        %v787 = vsub.f32 %v718, %v771
        %v788 = vsub.f32 %v719, %v771
        %v789 = vsub.f32 %v720, %v771
        %v790 = vsub.f32 %v721, %v771
        %v791 = vsub.f32 %v722, %v771
        %v792 = vsub.f32 %v723, %v771
        %v793 = vsub.f32 %v724, %v771
        %v794 = vsub.f32 %v725, %v771
        %v795 = vsub.f32 %v726, %v771
        %v796 = vsub.f32 %v727, %v771
        %v797 = vsub.f32 %v728, %v771
        %v798 = vsub.f32 %v729, %v771
        %v799 = vsub.f32 %v730, %v771
        %v800 = vsub.f32 %v731, %v771
        %v801 = vsub.f32 %v732, %v771
        %v802 = vsub.f32 %v733, %v771
        %v803 = vsub.f32 %v734, %v771
        %v804 = vperm.slane %v768, 0
        %v805 = vsub.f32 %v735, %v804
        %v806 = vsub.f32 %v736, %v804
        %v807 = vsub.f32 %v737, %v804
        %v808 = vsub.f32 %v738, %v804
        %v809 = vsub.f32 %v739, %v804
        %v810 = vsub.f32 %v740, %v804
        %v811 = vsub.f32 %v741, %v804
        %v812 = vsub.f32 %v742, %v804
        %v813 = vsub.f32 %v743, %v804
        %v814 = vsub.f32 %v744, %v804
        %v815 = vsub.f32 %v745, %v804
        %v816 = vsub.f32 %v746, %v804
        %v817 = vsub.f32 %v747, %v804
        %v818 = vsub.f32 %v748, %v804
        %v819 = vsub.f32 %v749, %v804
        %v820 = vsub.f32 %v750, %v804
        %v821 = vsub.f32 %v751, %v804
        %v822 = vsub.f32 %v752, %v804
        %v823 = vsub.f32 %v753, %v804
        %v824 = vsub.f32 %v754, %v804
        %v825 = vsub.f32 %v755, %v804
        %v826 = vsub.f32 %v756, %v804
        %v827 = vsub.f32 %v757, %v804
        %v828 = vsub.f32 %v758, %v804
        %v829 = vsub.f32 %v759, %v804
        %v830 = vsub.f32 %v760, %v804
        %v831 = vsub.f32 %v761, %v804
        %v832 = vsub.f32 %v762, %v804
        %v833 = vsub.f32 %v763, %v804
        %v834 = vsub.f32 %v764, %v804
        %v835 = vsub.f32 %v765, %v804
        %v836 = vsub.f32 %v766, %v804
        %v837 = vperm.slane %v769, 0
        %v838 = vmul.f32 %v837, %v805
        %v839 = vmul.f32 %v837, %v806
        %v840 = vmul.f32 %v837, %v807
        %v841 = vmul.f32 %v837, %v808
        %v842 = vmul.f32 %v837, %v809
        %v843 = vmul.f32 %v837, %v810
        %v844 = vmul.f32 %v837, %v811
        %v845 = vmul.f32 %v837, %v812
        %v846 = vmul.f32 %v837, %v813
        %v847 = vmul.f32 %v837, %v814
        %v848 = vmul.f32 %v837, %v815
        %v849 = vmul.f32 %v837, %v816
        %v850 = vmul.f32 %v837, %v817
        %v851 = vmul.f32 %v837, %v818
        %v852 = vmul.f32 %v837, %v819
        %v853 = vmul.f32 %v837, %v820
        %v854 = vmul.f32 %v837, %v821
        %v855 = vmul.f32 %v837, %v822
        %v856 = vmul.f32 %v837, %v823
        %v857 = vmul.f32 %v837, %v824
        %v858 = vmul.f32 %v837, %v825
        %v859 = vmul.f32 %v837, %v826
        %v860 = vmul.f32 %v837, %v827
        %v861 = vmul.f32 %v837, %v828
        %v862 = vmul.f32 %v837, %v829
        %v863 = vmul.f32 %v837, %v830
        %v864 = vmul.f32 %v837, %v831
        %v865 = vmul.f32 %v837, %v832
        %v866 = vmul.f32 %v837, %v833
        %v867 = vmul.f32 %v837, %v834
        %v868 = vmul.f32 %v837, %v835
        %v869 = vmul.f32 %v837, %v836
        %v870 = vperm.slane %v770, 0
        %v871 = vmul.f32 %v870, %v772
        %v872 = vmul.f32 %v870, %v773
        %v873 = vmul.f32 %v870, %v774
        %v874 = vmul.f32 %v870, %v775
        %v875 = vmul.f32 %v870, %v776
        %v876 = vmul.f32 %v870, %v777
        %v877 = vmul.f32 %v870, %v778
        %v878 = vmul.f32 %v870, %v779
        %v879 = vmul.f32 %v870, %v780
        %v880 = vmul.f32 %v870, %v781
        %v881 = vmul.f32 %v870, %v782
        %v882 = vmul.f32 %v870, %v783
        %v883 = vmul.f32 %v870, %v784
        %v884 = vmul.f32 %v870, %v785
        %v885 = vmul.f32 %v870, %v786
        %v886 = vmul.f32 %v870, %v787
        %v887 = vmul.f32 %v870, %v788
        %v888 = vmul.f32 %v870, %v789
        %v889 = vmul.f32 %v870, %v790
        %v890 = vmul.f32 %v870, %v791
        %v891 = vmul.f32 %v870, %v792
        %v892 = vmul.f32 %v870, %v793
        %v893 = vmul.f32 %v870, %v794
        %v894 = vmul.f32 %v870, %v795
        %v895 = vmul.f32 %v870, %v796
        %v896 = vmul.f32 %v870, %v797
        %v897 = vmul.f32 %v870, %v798
        %v898 = vmul.f32 %v870, %v799
        %v899 = vmul.f32 %v870, %v800
        %v900 = vmul.f32 %v870, %v801
        %v901 = vmul.f32 %v870, %v802
        %v902 = vmul.f32 %v870, %v803
        %v903 = vsub.f32 %v838, %v871
        %v904 = vsub.f32 %v839, %v872
        %v905 = vsub.f32 %v840, %v873
        %v906 = vsub.f32 %v841, %v874
        %v907 = vsub.f32 %v842, %v875
        %v908 = vsub.f32 %v843, %v876
        %v909 = vsub.f32 %v844, %v877
        %v910 = vsub.f32 %v845, %v878
        %v911 = vsub.f32 %v846, %v879
        %v912 = vsub.f32 %v847, %v880
        %v913 = vsub.f32 %v848, %v881
        %v914 = vsub.f32 %v849, %v882
        %v915 = vsub.f32 %v850, %v883
        %v916 = vsub.f32 %v851, %v884
        %v917 = vsub.f32 %v852, %v885
        %v918 = vsub.f32 %v853, %v886
        %v919 = vsub.f32 %v854, %v887
        %v920 = vsub.f32 %v855, %v888
        %v921 = vsub.f32 %v856, %v889
        %v922 = vsub.f32 %v857, %v890
        %v923 = vsub.f32 %v858, %v891
        %v924 = vsub.f32 %v859, %v892
        %v925 = vsub.f32 %v860, %v893
        %v926 = vsub.f32 %v861, %v894
        %v927 = vsub.f32 %v862, %v895
        %v928 = vsub.f32 %v863, %v896
        %v929 = vsub.f32 %v864, %v897
        %v930 = vsub.f32 %v865, %v898
        %v931 = vsub.f32 %v866, %v899
        %v932 = vsub.f32 %v867, %v900
        %v933 = vsub.f32 %v868, %v901
        %v934 = vsub.f32 %v869, %v902
        %v935 = vld [vmem:[%s187 + $0x5] sm:$0x1]
        %v936 = vld [vmem:[%s187 + $0x6] sm:$0x1]
        %v937 = vld [vmem:[%s187 + $0x7] sm:$0x1]
        %v938 = vld [vmem:[%s187 + $0x8] sm:$0x1]
        %v939 = vperm.slane %v935, 0
        %v940 = vsub.f32 %v703, %v939
        %v941 = vsub.f32 %v704, %v939
        %v942 = vsub.f32 %v705, %v939
        %v943 = vsub.f32 %v706, %v939
        %v944 = vsub.f32 %v707, %v939
        %v945 = vsub.f32 %v708, %v939
        %v946 = vsub.f32 %v709, %v939
        %v947 = vsub.f32 %v710, %v939
        %v948 = vsub.f32 %v711, %v939
        %v949 = vsub.f32 %v712, %v939
        %v950 = vsub.f32 %v713, %v939
        %v951 = vsub.f32 %v714, %v939
        %v952 = vsub.f32 %v715, %v939
        %v953 = vsub.f32 %v716, %v939
        %v954 = vsub.f32 %v717, %v939
        %v955 = vsub.f32 %v718, %v939
        %v956 = vsub.f32 %v719, %v939
        %v957 = vsub.f32 %v720, %v939
        %v958 = vsub.f32 %v721, %v939
        %v959 = vsub.f32 %v722, %v939
        %v960 = vsub.f32 %v723, %v939
        %v961 = vsub.f32 %v724, %v939
        %v962 = vsub.f32 %v725, %v939
        %v963 = vsub.f32 %v726, %v939
        %v964 = vsub.f32 %v727, %v939
        %v965 = vsub.f32 %v728, %v939
        %v966 = vsub.f32 %v729, %v939
        %v967 = vsub.f32 %v730, %v939
        %v968 = vsub.f32 %v731, %v939
        %v969 = vsub.f32 %v732, %v939
        %v970 = vsub.f32 %v733, %v939
        %v971 = vsub.f32 %v734, %v939
        %v972 = vperm.slane %v936, 0
        %v973 = vsub.f32 %v735, %v972
        %v974 = vsub.f32 %v736, %v972
        %v975 = vsub.f32 %v737, %v972
        %v976 = vsub.f32 %v738, %v972
        %v977 = vsub.f32 %v739, %v972
        %v978 = vsub.f32 %v740, %v972
        %v979 = vsub.f32 %v741, %v972
        %v980 = vsub.f32 %v742, %v972
        %v981 = vsub.f32 %v743, %v972
        %v982 = vsub.f32 %v744, %v972
        %v983 = vsub.f32 %v745, %v972
        %v984 = vsub.f32 %v746, %v972
        %v985 = vsub.f32 %v747, %v972
        %v986 = vsub.f32 %v748, %v972
        %v987 = vsub.f32 %v749, %v972
        %v988 = vsub.f32 %v750, %v972
        %v989 = vsub.f32 %v751, %v972
        %v990 = vsub.f32 %v752, %v972
        %v991 = vsub.f32 %v753, %v972
        %v992 = vsub.f32 %v754, %v972
        %v993 = vsub.f32 %v755, %v972
        %v994 = vsub.f32 %v756, %v972
        %v995 = vsub.f32 %v757, %v972
        %v996 = vsub.f32 %v758, %v972
        %v997 = vsub.f32 %v759, %v972
        %v998 = vsub.f32 %v760, %v972
        %v999 = vsub.f32 %v761, %v972
        %v1000 = vsub.f32 %v762, %v972
        %v1001 = vsub.f32 %v763, %v972
        %v1002 = vsub.f32 %v764, %v972
        %v1003 = vsub.f32 %v765, %v972
        %v1004 = vsub.f32 %v766, %v972
        %v1005 = vperm.slane %v937, 0
        %v1006 = vmul.f32 %v1005, %v973
        %v1007 = vmul.f32 %v1005, %v974
        %v1008 = vmul.f32 %v1005, %v975
        %v1009 = vmul.f32 %v1005, %v976
        %v1010 = vmul.f32 %v1005, %v977
        %v1011 = vmul.f32 %v1005, %v978
        %v1012 = vmul.f32 %v1005, %v979
        %v1013 = vmul.f32 %v1005, %v980
        %v1014 = vmul.f32 %v1005, %v981
        %v1015 = vmul.f32 %v1005, %v982
        %v1016 = vmul.f32 %v1005, %v983
        %v1017 = vmul.f32 %v1005, %v984
        %v1018 = vmul.f32 %v1005, %v985
        %v1019 = vmul.f32 %v1005, %v986
        %v1020 = vmul.f32 %v1005, %v987
        %v1021 = vmul.f32 %v1005, %v988
        %v1022 = vmul.f32 %v1005, %v989
        %v1023 = vmul.f32 %v1005, %v990
        %v1024 = vmul.f32 %v1005, %v991
        %v1025 = vmul.f32 %v1005, %v992
        %v1026 = vmul.f32 %v1005, %v993
        %v1027 = vmul.f32 %v1005, %v994
        %v1028 = vmul.f32 %v1005, %v995
        %v1029 = vmul.f32 %v1005, %v996
        %v1030 = vmul.f32 %v1005, %v997
        %v1031 = vmul.f32 %v1005, %v998
        %v1032 = vmul.f32 %v1005, %v999
        %v1033 = vmul.f32 %v1005, %v1000
        %v1034 = vmul.f32 %v1005, %v1001
        %v1035 = vmul.f32 %v1005, %v1002
        %v1036 = vmul.f32 %v1005, %v1003
        %v1037 = vmul.f32 %v1005, %v1004
        %v1038 = vperm.slane %v938, 0
        %v1039 = vmul.f32 %v1038, %v940
        %v1040 = vmul.f32 %v1038, %v941
        %v1041 = vmul.f32 %v1038, %v942
        %v1042 = vmul.f32 %v1038, %v943
        %v1043 = vmul.f32 %v1038, %v944
        %v1044 = vmul.f32 %v1038, %v945
        %v1045 = vmul.f32 %v1038, %v946
        %v1046 = vmul.f32 %v1038, %v947
        %v1047 = vmul.f32 %v1038, %v948
        %v1048 = vmul.f32 %v1038, %v949
        %v1049 = vmul.f32 %v1038, %v950
        %v1050 = vmul.f32 %v1038, %v951
        %v1051 = vmul.f32 %v1038, %v952
        %v1052 = vmul.f32 %v1038, %v953
        %v1053 = vmul.f32 %v1038, %v954
        %v1054 = vmul.f32 %v1038, %v955
        %v1055 = vmul.f32 %v1038, %v956
        %v1056 = vmul.f32 %v1038, %v957
        %v1057 = vmul.f32 %v1038, %v958
        %v1058 = vmul.f32 %v1038, %v959
        %v1059 = vmul.f32 %v1038, %v960
        %v1060 = vmul.f32 %v1038, %v961
        %v1061 = vmul.f32 %v1038, %v962
        %v1062 = vmul.f32 %v1038, %v963
        %v1063 = vmul.f32 %v1038, %v964
        %v1064 = vmul.f32 %v1038, %v965
        %v1065 = vmul.f32 %v1038, %v966
        %v1066 = vmul.f32 %v1038, %v967
        %v1067 = vmul.f32 %v1038, %v968
        %v1068 = vmul.f32 %v1038, %v969
        %v1069 = vmul.f32 %v1038, %v970
        %v1070 = vmul.f32 %v1038, %v971
        %v1071 = vsub.f32 %v1006, %v1039
        %v1072 = vsub.f32 %v1007, %v1040
        %v1073 = vsub.f32 %v1008, %v1041
        %v1074 = vsub.f32 %v1009, %v1042
        %v1075 = vsub.f32 %v1010, %v1043
        %v1076 = vsub.f32 %v1011, %v1044
        %v1077 = vsub.f32 %v1012, %v1045
        %v1078 = vsub.f32 %v1013, %v1046
        %v1079 = vsub.f32 %v1014, %v1047
        %v1080 = vsub.f32 %v1015, %v1048
        %v1081 = vsub.f32 %v1016, %v1049
        %v1082 = vsub.f32 %v1017, %v1050
        %v1083 = vsub.f32 %v1018, %v1051
        %v1084 = vsub.f32 %v1019, %v1052
        %v1085 = vsub.f32 %v1020, %v1053
        %v1086 = vsub.f32 %v1021, %v1054
        %v1087 = vsub.f32 %v1022, %v1055
        %v1088 = vsub.f32 %v1023, %v1056
        %v1089 = vsub.f32 %v1024, %v1057
        %v1090 = vsub.f32 %v1025, %v1058
        %v1091 = vsub.f32 %v1026, %v1059
        %v1092 = vsub.f32 %v1027, %v1060
        %v1093 = vsub.f32 %v1028, %v1061
        %v1094 = vsub.f32 %v1029, %v1062
        %v1095 = vsub.f32 %v1030, %v1063
        %v1096 = vsub.f32 %v1031, %v1064
        %v1097 = vsub.f32 %v1032, %v1065
        %v1098 = vsub.f32 %v1033, %v1066
        %v1099 = vsub.f32 %v1034, %v1067
        %v1100 = vsub.f32 %v1035, %v1068
        %v1101 = vsub.f32 %v1036, %v1069
        %v1102 = vsub.f32 %v1037, %v1070
        %v1103 = vmin.f32 %v903, %v1071
        %v1104 = vmin.f32 %v904, %v1072
        %v1105 = vmin.f32 %v905, %v1073
        %v1106 = vmin.f32 %v906, %v1074
        %v1107 = vmin.f32 %v907, %v1075
        %v1108 = vmin.f32 %v908, %v1076
        %v1109 = vmin.f32 %v909, %v1077
        %v1110 = vmin.f32 %v910, %v1078
        %v1111 = vmin.f32 %v911, %v1079
        %v1112 = vmin.f32 %v912, %v1080
        %v1113 = vmin.f32 %v913, %v1081
        %v1114 = vmin.f32 %v914, %v1082
        %v1115 = vmin.f32 %v915, %v1083
        %v1116 = vmin.f32 %v916, %v1084
        %v1117 = vmin.f32 %v917, %v1085
        %v1118 = vmin.f32 %v918, %v1086
        %v1119 = vmin.f32 %v919, %v1087
        %v1120 = vmin.f32 %v920, %v1088
        %v1121 = vmin.f32 %v921, %v1089
        %v1122 = vmin.f32 %v922, %v1090
        %v1123 = vmin.f32 %v923, %v1091
        %v1124 = vmin.f32 %v924, %v1092
        %v1125 = vmin.f32 %v925, %v1093
        %v1126 = vmin.f32 %v926, %v1094
        %v1127 = vmin.f32 %v927, %v1095
        %v1128 = vmin.f32 %v928, %v1096
        %v1129 = vmin.f32 %v929, %v1097
        %v1130 = vmin.f32 %v930, %v1098
        %v1131 = vmin.f32 %v931, %v1099
        %v1132 = vmin.f32 %v932, %v1100
        %v1133 = vmin.f32 %v933, %v1101
        %v1134 = vmin.f32 %v934, %v1102
        %v1135 = vmax.f32 %v903, %v1071
        %v1136 = vmax.f32 %v904, %v1072
        %v1137 = vmax.f32 %v905, %v1073
        %v1138 = vmax.f32 %v906, %v1074
        %v1139 = vmax.f32 %v907, %v1075
        %v1140 = vmax.f32 %v908, %v1076
        %v1141 = vmax.f32 %v909, %v1077
        %v1142 = vmax.f32 %v910, %v1078
        %v1143 = vmax.f32 %v911, %v1079
        %v1144 = vmax.f32 %v912, %v1080
        %v1145 = vmax.f32 %v913, %v1081
        %v1146 = vmax.f32 %v914, %v1082
        %v1147 = vmax.f32 %v915, %v1083
        %v1148 = vmax.f32 %v916, %v1084
        %v1149 = vmax.f32 %v917, %v1085
        %v1150 = vmax.f32 %v918, %v1086
        %v1151 = vmax.f32 %v919, %v1087
        %v1152 = vmax.f32 %v920, %v1088
        %v1153 = vmax.f32 %v921, %v1089
        %v1154 = vmax.f32 %v922, %v1090
        %v1155 = vmax.f32 %v923, %v1091
        %v1156 = vmax.f32 %v924, %v1092
        %v1157 = vmax.f32 %v925, %v1093
        %v1158 = vmax.f32 %v926, %v1094
        %v1159 = vmax.f32 %v927, %v1095
        %v1160 = vmax.f32 %v928, %v1096
        %v1161 = vmax.f32 %v929, %v1097
        %v1162 = vmax.f32 %v930, %v1098
        %v1163 = vmax.f32 %v931, %v1099
        %v1164 = vmax.f32 %v932, %v1100
        %v1165 = vmax.f32 %v933, %v1101
        %v1166 = vmax.f32 %v934, %v1102
        %v1167 = vld [vmem:[%s187 + $0xa] sm:$0x1]
        %v1168 = vld [vmem:[%s187 + $0xb] sm:$0x1]
        %v1169 = vld [vmem:[%s187 + $0xc] sm:$0x1]
        %v1170 = vld [vmem:[%s187 + $0xd] sm:$0x1]
        %v1171 = vperm.slane %v1167, 0
        %v1172 = vsub.f32 %v703, %v1171
        %v1173 = vsub.f32 %v704, %v1171
        %v1174 = vsub.f32 %v705, %v1171
        %v1175 = vsub.f32 %v706, %v1171
        %v1176 = vsub.f32 %v707, %v1171
        %v1177 = vsub.f32 %v708, %v1171
        %v1178 = vsub.f32 %v709, %v1171
        %v1179 = vsub.f32 %v710, %v1171
        %v1180 = vsub.f32 %v711, %v1171
        %v1181 = vsub.f32 %v712, %v1171
        %v1182 = vsub.f32 %v713, %v1171
        %v1183 = vsub.f32 %v714, %v1171
        %v1184 = vsub.f32 %v715, %v1171
        %v1185 = vsub.f32 %v716, %v1171
        %v1186 = vsub.f32 %v717, %v1171
        %v1187 = vsub.f32 %v718, %v1171
        %v1188 = vsub.f32 %v719, %v1171
        %v1189 = vsub.f32 %v720, %v1171
        %v1190 = vsub.f32 %v721, %v1171
        %v1191 = vsub.f32 %v722, %v1171
        %v1192 = vsub.f32 %v723, %v1171
        %v1193 = vsub.f32 %v724, %v1171
        %v1194 = vsub.f32 %v725, %v1171
        %v1195 = vsub.f32 %v726, %v1171
        %v1196 = vsub.f32 %v727, %v1171
        %v1197 = vsub.f32 %v728, %v1171
        %v1198 = vsub.f32 %v729, %v1171
        %v1199 = vsub.f32 %v730, %v1171
        %v1200 = vsub.f32 %v731, %v1171
        %v1201 = vsub.f32 %v732, %v1171
        %v1202 = vsub.f32 %v733, %v1171
        %v1203 = vsub.f32 %v734, %v1171
        %v1204 = vperm.slane %v1168, 0
        %v1205 = vsub.f32 %v735, %v1204
        %v1206 = vsub.f32 %v736, %v1204
        %v1207 = vsub.f32 %v737, %v1204
        %v1208 = vsub.f32 %v738, %v1204
        %v1209 = vsub.f32 %v739, %v1204
        %v1210 = vsub.f32 %v740, %v1204
        %v1211 = vsub.f32 %v741, %v1204
        %v1212 = vsub.f32 %v742, %v1204
        %v1213 = vsub.f32 %v743, %v1204
        %v1214 = vsub.f32 %v744, %v1204
        %v1215 = vsub.f32 %v745, %v1204
        %v1216 = vsub.f32 %v746, %v1204
        %v1217 = vsub.f32 %v747, %v1204
        %v1218 = vsub.f32 %v748, %v1204
        %v1219 = vsub.f32 %v749, %v1204
        %v1220 = vsub.f32 %v750, %v1204
        %v1221 = vsub.f32 %v751, %v1204
        %v1222 = vsub.f32 %v752, %v1204
        %v1223 = vsub.f32 %v753, %v1204
        %v1224 = vsub.f32 %v754, %v1204
        %v1225 = vsub.f32 %v755, %v1204
        %v1226 = vsub.f32 %v756, %v1204
        %v1227 = vsub.f32 %v757, %v1204
        %v1228 = vsub.f32 %v758, %v1204
        %v1229 = vsub.f32 %v759, %v1204
        %v1230 = vsub.f32 %v760, %v1204
        %v1231 = vsub.f32 %v761, %v1204
        %v1232 = vsub.f32 %v762, %v1204
        %v1233 = vsub.f32 %v763, %v1204
        %v1234 = vsub.f32 %v764, %v1204
        %v1235 = vsub.f32 %v765, %v1204
        %v1236 = vsub.f32 %v766, %v1204
        %v1237 = vperm.slane %v1169, 0
        %v1238 = vmul.f32 %v1237, %v1205
        %v1239 = vmul.f32 %v1237, %v1206
        %v1240 = vmul.f32 %v1237, %v1207
        %v1241 = vmul.f32 %v1237, %v1208
        %v1242 = vmul.f32 %v1237, %v1209
        %v1243 = vmul.f32 %v1237, %v1210
        %v1244 = vmul.f32 %v1237, %v1211
        %v1245 = vmul.f32 %v1237, %v1212
        %v1246 = vmul.f32 %v1237, %v1213
        %v1247 = vmul.f32 %v1237, %v1214
        %v1248 = vmul.f32 %v1237, %v1215
        %v1249 = vmul.f32 %v1237, %v1216
        %v1250 = vmul.f32 %v1237, %v1217
        %v1251 = vmul.f32 %v1237, %v1218
        %v1252 = vmul.f32 %v1237, %v1219
        %v1253 = vmul.f32 %v1237, %v1220
        %v1254 = vmul.f32 %v1237, %v1221
        %v1255 = vmul.f32 %v1237, %v1222
        %v1256 = vmul.f32 %v1237, %v1223
        %v1257 = vmul.f32 %v1237, %v1224
        %v1258 = vmul.f32 %v1237, %v1225
        %v1259 = vmul.f32 %v1237, %v1226
        %v1260 = vmul.f32 %v1237, %v1227
        %v1261 = vmul.f32 %v1237, %v1228
        %v1262 = vmul.f32 %v1237, %v1229
        %v1263 = vmul.f32 %v1237, %v1230
        %v1264 = vmul.f32 %v1237, %v1231
        %v1265 = vmul.f32 %v1237, %v1232
        %v1266 = vmul.f32 %v1237, %v1233
        %v1267 = vmul.f32 %v1237, %v1234
        %v1268 = vmul.f32 %v1237, %v1235
        %v1269 = vmul.f32 %v1237, %v1236
        %v1270 = vperm.slane %v1170, 0
        %v1271 = vmul.f32 %v1270, %v1172
        %v1272 = vmul.f32 %v1270, %v1173
        %v1273 = vmul.f32 %v1270, %v1174
        %v1274 = vmul.f32 %v1270, %v1175
        %v1275 = vmul.f32 %v1270, %v1176
        %v1276 = vmul.f32 %v1270, %v1177
        %v1277 = vmul.f32 %v1270, %v1178
        %v1278 = vmul.f32 %v1270, %v1179
        %v1279 = vmul.f32 %v1270, %v1180
        %v1280 = vmul.f32 %v1270, %v1181
        %v1281 = vmul.f32 %v1270, %v1182
        %v1282 = vmul.f32 %v1270, %v1183
        %v1283 = vmul.f32 %v1270, %v1184
        %v1284 = vmul.f32 %v1270, %v1185
        %v1285 = vmul.f32 %v1270, %v1186
        %v1286 = vmul.f32 %v1270, %v1187
        %v1287 = vmul.f32 %v1270, %v1188
        %v1288 = vmul.f32 %v1270, %v1189
        %v1289 = vmul.f32 %v1270, %v1190
        %v1290 = vmul.f32 %v1270, %v1191
        %v1291 = vmul.f32 %v1270, %v1192
        %v1292 = vmul.f32 %v1270, %v1193
        %v1293 = vmul.f32 %v1270, %v1194
        %v1294 = vmul.f32 %v1270, %v1195
        %v1295 = vmul.f32 %v1270, %v1196
        %v1296 = vmul.f32 %v1270, %v1197
        %v1297 = vmul.f32 %v1270, %v1198
        %v1298 = vmul.f32 %v1270, %v1199
        %v1299 = vmul.f32 %v1270, %v1200
        %v1300 = vmul.f32 %v1270, %v1201
        %v1301 = vmul.f32 %v1270, %v1202
        %v1302 = vmul.f32 %v1270, %v1203
        %v1303 = vsub.f32 %v1238, %v1271
        %v1304 = vsub.f32 %v1239, %v1272
        %v1305 = vsub.f32 %v1240, %v1273
        %v1306 = vsub.f32 %v1241, %v1274
        %v1307 = vsub.f32 %v1242, %v1275
        %v1308 = vsub.f32 %v1243, %v1276
        %v1309 = vsub.f32 %v1244, %v1277
        %v1310 = vsub.f32 %v1245, %v1278
        %v1311 = vsub.f32 %v1246, %v1279
        %v1312 = vsub.f32 %v1247, %v1280
        %v1313 = vsub.f32 %v1248, %v1281
        %v1314 = vsub.f32 %v1249, %v1282
        %v1315 = vsub.f32 %v1250, %v1283
        %v1316 = vsub.f32 %v1251, %v1284
        %v1317 = vsub.f32 %v1252, %v1285
        %v1318 = vsub.f32 %v1253, %v1286
        %v1319 = vsub.f32 %v1254, %v1287
        %v1320 = vsub.f32 %v1255, %v1288
        %v1321 = vsub.f32 %v1256, %v1289
        %v1322 = vsub.f32 %v1257, %v1290
        %v1323 = vsub.f32 %v1258, %v1291
        %v1324 = vsub.f32 %v1259, %v1292
        %v1325 = vsub.f32 %v1260, %v1293
        %v1326 = vsub.f32 %v1261, %v1294
        %v1327 = vsub.f32 %v1262, %v1295
        %v1328 = vsub.f32 %v1263, %v1296
        %v1329 = vsub.f32 %v1264, %v1297
        %v1330 = vsub.f32 %v1265, %v1298
        %v1331 = vsub.f32 %v1266, %v1299
        %v1332 = vsub.f32 %v1267, %v1300
        %v1333 = vsub.f32 %v1268, %v1301
        %v1334 = vsub.f32 %v1269, %v1302
        %v1335 = vmin.f32 %v1103, %v1303
        %v1336 = vmin.f32 %v1104, %v1304
        %v1337 = vmin.f32 %v1105, %v1305
        %v1338 = vmin.f32 %v1106, %v1306
        %v1339 = vmin.f32 %v1107, %v1307
        %v1340 = vmin.f32 %v1108, %v1308
        %v1341 = vmin.f32 %v1109, %v1309
        %v1342 = vmin.f32 %v1110, %v1310
        %v1343 = vmin.f32 %v1111, %v1311
        %v1344 = vmin.f32 %v1112, %v1312
        %v1345 = vmin.f32 %v1113, %v1313
        %v1346 = vmin.f32 %v1114, %v1314
        %v1347 = vmin.f32 %v1115, %v1315
        %v1348 = vmin.f32 %v1116, %v1316
        %v1349 = vmin.f32 %v1117, %v1317
        %v1350 = vmin.f32 %v1118, %v1318
        %v1351 = vmin.f32 %v1119, %v1319
        %v1352 = vmin.f32 %v1120, %v1320
        %v1353 = vmin.f32 %v1121, %v1321
        %v1354 = vmin.f32 %v1122, %v1322
        %v1355 = vmin.f32 %v1123, %v1323
        %v1356 = vmin.f32 %v1124, %v1324
        %v1357 = vmin.f32 %v1125, %v1325
        %v1358 = vmin.f32 %v1126, %v1326
        %v1359 = vmin.f32 %v1127, %v1327
        %v1360 = vmin.f32 %v1128, %v1328
        %v1361 = vmin.f32 %v1129, %v1329
        %v1362 = vmin.f32 %v1130, %v1330
        %v1363 = vmin.f32 %v1131, %v1331
        %v1364 = vmin.f32 %v1132, %v1332
        %v1365 = vmin.f32 %v1133, %v1333
        %v1366 = vmin.f32 %v1134, %v1334
        %v1367 = vmax.f32 %v1135, %v1303
        %v1368 = vmax.f32 %v1136, %v1304
        %v1369 = vmax.f32 %v1137, %v1305
        %v1370 = vmax.f32 %v1138, %v1306
        %v1371 = vmax.f32 %v1139, %v1307
        %v1372 = vmax.f32 %v1140, %v1308
        %v1373 = vmax.f32 %v1141, %v1309
        %v1374 = vmax.f32 %v1142, %v1310
        %v1375 = vmax.f32 %v1143, %v1311
        %v1376 = vmax.f32 %v1144, %v1312
        %v1377 = vmax.f32 %v1145, %v1313
        %v1378 = vmax.f32 %v1146, %v1314
        %v1379 = vmax.f32 %v1147, %v1315
        %v1380 = vmax.f32 %v1148, %v1316
        %v1381 = vmax.f32 %v1149, %v1317
        %v1382 = vmax.f32 %v1150, %v1318
        %v1383 = vmax.f32 %v1151, %v1319
        %v1384 = vmax.f32 %v1152, %v1320
        %v1385 = vmax.f32 %v1153, %v1321
        %v1386 = vmax.f32 %v1154, %v1322
        %v1387 = vmax.f32 %v1155, %v1323
        %v1388 = vmax.f32 %v1156, %v1324
        %v1389 = vmax.f32 %v1157, %v1325
        %v1390 = vmax.f32 %v1158, %v1326
        %v1391 = vmax.f32 %v1159, %v1327
        %v1392 = vmax.f32 %v1160, %v1328
        %v1393 = vmax.f32 %v1161, %v1329
        %v1394 = vmax.f32 %v1162, %v1330
        %v1395 = vmax.f32 %v1163, %v1331
        %v1396 = vmax.f32 %v1164, %v1332
        %v1397 = vmax.f32 %v1165, %v1333
        %v1398 = vmax.f32 %v1166, %v1334
        %vm1399 = vcmp.ge.f32.partialorder %v1335, 0.0
        %vm1400 = vcmp.ge.f32.partialorder %v1336, 0.0
        %vm1401 = vcmp.ge.f32.partialorder %v1337, 0.0
        %vm1402 = vcmp.ge.f32.partialorder %v1338, 0.0
        %vm1403 = vcmp.ge.f32.partialorder %v1339, 0.0
        %vm1404 = vcmp.ge.f32.partialorder %v1340, 0.0
        %vm1405 = vcmp.ge.f32.partialorder %v1341, 0.0
        %vm1406 = vcmp.ge.f32.partialorder %v1342, 0.0
        %vm1407 = vcmp.ge.f32.partialorder %v1343, 0.0
        %vm1408 = vcmp.ge.f32.partialorder %v1344, 0.0
        %vm1409 = vcmp.ge.f32.partialorder %v1345, 0.0
        %vm1410 = vcmp.ge.f32.partialorder %v1346, 0.0
        %vm1411 = vcmp.ge.f32.partialorder %v1347, 0.0
        %vm1412 = vcmp.ge.f32.partialorder %v1348, 0.0
        %vm1413 = vcmp.ge.f32.partialorder %v1349, 0.0
        %vm1414 = vcmp.ge.f32.partialorder %v1350, 0.0
        %vm1415 = vcmp.ge.f32.partialorder %v1351, 0.0
        %vm1416 = vcmp.ge.f32.partialorder %v1352, 0.0
        %vm1417 = vcmp.ge.f32.partialorder %v1353, 0.0
        %vm1418 = vcmp.ge.f32.partialorder %v1354, 0.0
        %vm1419 = vcmp.ge.f32.partialorder %v1355, 0.0
        %vm1420 = vcmp.ge.f32.partialorder %v1356, 0.0
        %vm1421 = vcmp.ge.f32.partialorder %v1357, 0.0
        %vm1422 = vcmp.ge.f32.partialorder %v1358, 0.0
        %vm1423 = vcmp.ge.f32.partialorder %v1359, 0.0
        %vm1424 = vcmp.ge.f32.partialorder %v1360, 0.0
        %vm1425 = vcmp.ge.f32.partialorder %v1361, 0.0
        %vm1426 = vcmp.ge.f32.partialorder %v1362, 0.0
        %vm1427 = vcmp.ge.f32.partialorder %v1363, 0.0
        %vm1428 = vcmp.ge.f32.partialorder %v1364, 0.0
        %vm1429 = vcmp.ge.f32.partialorder %v1365, 0.0
        %vm1430 = vcmp.ge.f32.partialorder %v1366, 0.0
        %vm1431 = vcmp.le.f32.partialorder %v1367, 0.0
        %vm1432 = vcmp.le.f32.partialorder %v1368, 0.0
        %vm1433 = vcmp.le.f32.partialorder %v1369, 0.0
        %vm1434 = vcmp.le.f32.partialorder %v1370, 0.0
        %vm1435 = vcmp.le.f32.partialorder %v1371, 0.0
        %vm1436 = vcmp.le.f32.partialorder %v1372, 0.0
        %vm1437 = vcmp.le.f32.partialorder %v1373, 0.0
        %vm1438 = vcmp.le.f32.partialorder %v1374, 0.0
        %vm1439 = vcmp.le.f32.partialorder %v1375, 0.0
        %vm1440 = vcmp.le.f32.partialorder %v1376, 0.0
        %vm1441 = vcmp.le.f32.partialorder %v1377, 0.0
        %vm1442 = vcmp.le.f32.partialorder %v1378, 0.0
        %vm1443 = vcmp.le.f32.partialorder %v1379, 0.0
        %vm1444 = vcmp.le.f32.partialorder %v1380, 0.0
        %vm1445 = vcmp.le.f32.partialorder %v1381, 0.0
        %vm1446 = vcmp.le.f32.partialorder %v1382, 0.0
        %vm1447 = vcmp.le.f32.partialorder %v1383, 0.0
        %vm1448 = vcmp.le.f32.partialorder %v1384, 0.0
        %vm1449 = vcmp.le.f32.partialorder %v1385, 0.0
        %vm1450 = vcmp.le.f32.partialorder %v1386, 0.0
        %vm1451 = vcmp.le.f32.partialorder %v1387, 0.0
        %vm1452 = vcmp.le.f32.partialorder %v1388, 0.0
        %vm1453 = vcmp.le.f32.partialorder %v1389, 0.0
        %vm1454 = vcmp.le.f32.partialorder %v1390, 0.0
        %vm1455 = vcmp.le.f32.partialorder %v1391, 0.0
        %vm1456 = vcmp.le.f32.partialorder %v1392, 0.0
        %vm1457 = vcmp.le.f32.partialorder %v1393, 0.0
        %vm1458 = vcmp.le.f32.partialorder %v1394, 0.0
        %vm1459 = vcmp.le.f32.partialorder %v1395, 0.0
        %vm1460 = vcmp.le.f32.partialorder %v1396, 0.0
        %vm1461 = vcmp.le.f32.partialorder %v1397, 0.0
        %vm1462 = vcmp.le.f32.partialorder %v1398, 0.0
        %vm1463 = vmor %vm1399, %vm1431
        %vm1464 = vmor %vm1400, %vm1432
        %vm1465 = vmor %vm1401, %vm1433
        %vm1466 = vmor %vm1402, %vm1434
        %vm1467 = vmor %vm1403, %vm1435
        %vm1468 = vmor %vm1404, %vm1436
        %vm1469 = vmor %vm1405, %vm1437
        %vm1470 = vmor %vm1406, %vm1438
        %vm1471 = vmor %vm1407, %vm1439
        %vm1472 = vmor %vm1408, %vm1440
        %vm1473 = vmor %vm1409, %vm1441
        %vm1474 = vmor %vm1410, %vm1442
        %vm1475 = vmor %vm1411, %vm1443
        %vm1476 = vmor %vm1412, %vm1444
        %vm1477 = vmor %vm1413, %vm1445
        %vm1478 = vmor %vm1414, %vm1446
        %vm1479 = vmor %vm1415, %vm1447
        %vm1480 = vmor %vm1416, %vm1448
        %vm1481 = vmor %vm1417, %vm1449
        %vm1482 = vmor %vm1418, %vm1450
        %vm1483 = vmor %vm1419, %vm1451
        %vm1484 = vmor %vm1420, %vm1452
        %vm1485 = vmor %vm1421, %vm1453
        %vm1486 = vmor %vm1422, %vm1454
        %vm1487 = vmor %vm1423, %vm1455
        %vm1488 = vmor %vm1424, %vm1456
        %vm1489 = vmor %vm1425, %vm1457
        %vm1490 = vmor %vm1426, %vm1458
        %vm1491 = vmor %vm1427, %vm1459
        %vm1492 = vmor %vm1428, %vm1460
        %vm1493 = vmor %vm1429, %vm1461
        %vm1494 = vmor %vm1430, %vm1462
        %v1495 = vld [vmem:[#allocation4] sm:$0xff]
        %v1496 = vld [vmem:[#allocation4 + $0x8] sm:$0xff]
        %v1497 = vld [vmem:[#allocation4 + $0x10] sm:$0xff]
        %v1498 = vld [vmem:[#allocation4 + $0x18] sm:$0xff]
        %v1499 = vld [vmem:[#allocation4 + $0x20] sm:$0xff]
        %v1500 = vld [vmem:[#allocation4 + $0x28] sm:$0xff]
        %v1501 = vld [vmem:[#allocation4 + $0x30] sm:$0xff]
        %v1502 = vld [vmem:[#allocation4 + $0x38] sm:$0xff]
        %v1503 = vld [vmem:[#allocation4 + $0x40] sm:$0xff]
        %v1504 = vld [vmem:[#allocation4 + $0x48] sm:$0xff]
        %v1505 = vld [vmem:[#allocation4 + $0x50] sm:$0xff]
        %v1506 = vld [vmem:[#allocation4 + $0x58] sm:$0xff]
        %v1507 = vld [vmem:[#allocation4 + $0x60] sm:$0xff]
        %v1508 = vld [vmem:[#allocation4 + $0x68] sm:$0xff]
        %v1509 = vld [vmem:[#allocation4 + $0x70] sm:$0xff]
        %v1510 = vld [vmem:[#allocation4 + $0x78] sm:$0xff]
        %v1511 = vld [vmem:[#allocation4 + $0x80] sm:$0xff]
        %v1512 = vld [vmem:[#allocation4 + $0x88] sm:$0xff]
        %v1513 = vld [vmem:[#allocation4 + $0x90] sm:$0xff]
        %v1514 = vld [vmem:[#allocation4 + $0x98] sm:$0xff]
        %v1515 = vld [vmem:[#allocation4 + $0xa0] sm:$0xff]
        %v1516 = vld [vmem:[#allocation4 + $0xa8] sm:$0xff]
        %v1517 = vld [vmem:[#allocation4 + $0xb0] sm:$0xff]
        %v1518 = vld [vmem:[#allocation4 + $0xb8] sm:$0xff]
        %v1519 = vld [vmem:[#allocation4 + $0xc0] sm:$0xff]
        %v1520 = vld [vmem:[#allocation4 + $0xc8] sm:$0xff]
        %v1521 = vld [vmem:[#allocation4 + $0xd0] sm:$0xff]
        %v1522 = vld [vmem:[#allocation4 + $0xd8] sm:$0xff]
        %v1523 = vld [vmem:[#allocation4 + $0xe0] sm:$0xff]
        %v1524 = vld [vmem:[#allocation4 + $0xe8] sm:$0xff]
        %v1525 = vld [vmem:[#allocation4 + $0xf0] sm:$0xff]
        %v1526 = vld [vmem:[#allocation4 + $0xf8] sm:$0xff]
        %v1527 = vsel %vm1463, 0.0, %v1495
        %v1528 = vsel %vm1464, 0.0, %v1496
        %v1529 = vsel %vm1465, 0.0, %v1497
        %v1530 = vsel %vm1466, 0.0, %v1498
        %v1531 = vsel %vm1467, 0.0, %v1499
        %v1532 = vsel %vm1468, 0.0, %v1500
        %v1533 = vsel %vm1469, 0.0, %v1501
        %v1534 = vsel %vm1470, 0.0, %v1502
        %v1535 = vsel %vm1471, 0.0, %v1503
        %v1536 = vsel %vm1472, 0.0, %v1504
        %v1537 = vsel %vm1473, 0.0, %v1505
        %v1538 = vsel %vm1474, 0.0, %v1506
        %v1539 = vsel %vm1475, 0.0, %v1507
        %v1540 = vsel %vm1476, 0.0, %v1508
        %v1541 = vsel %vm1477, 0.0, %v1509
        %v1542 = vsel %vm1478, 0.0, %v1510
        %v1543 = vsel %vm1479, 0.0, %v1511
        %v1544 = vsel %vm1480, 0.0, %v1512
        %v1545 = vsel %vm1481, 0.0, %v1513
        %v1546 = vsel %vm1482, 0.0, %v1514
        %v1547 = vsel %vm1483, 0.0, %v1515
        %v1548 = vsel %vm1484, 0.0, %v1516
        %v1549 = vsel %vm1485, 0.0, %v1517
        %v1550 = vsel %vm1486, 0.0, %v1518
        %v1551 = vsel %vm1487, 0.0, %v1519
        %v1552 = vsel %vm1488, 0.0, %v1520
        %v1553 = vsel %vm1489, 0.0, %v1521
        %v1554 = vsel %vm1490, 0.0, %v1522
        %v1555 = vsel %vm1491, 0.0, %v1523
        %v1556 = vsel %vm1492, 0.0, %v1524
        %v1557 = vsel %vm1493, 0.0, %v1525
        %v1558 = vsel %vm1494, 0.0, %v1526
        %1559 = vst [vmem:[#allocation4] sm:$0xff] %v1527
        %1560 = vst [vmem:[#allocation4 + $0x8] sm:$0xff] %v1528
        %1561 = vst [vmem:[#allocation4 + $0x10] sm:$0xff] %v1529
        %1562 = vst [vmem:[#allocation4 + $0x18] sm:$0xff] %v1530
        %1563 = vst [vmem:[#allocation4 + $0x20] sm:$0xff] %v1531
        %1564 = vst [vmem:[#allocation4 + $0x28] sm:$0xff] %v1532
        %1565 = vst [vmem:[#allocation4 + $0x30] sm:$0xff] %v1533
        %1566 = vst [vmem:[#allocation4 + $0x38] sm:$0xff] %v1534
        %1567 = vst [vmem:[#allocation4 + $0x40] sm:$0xff] %v1535
        %1568 = vst [vmem:[#allocation4 + $0x48] sm:$0xff] %v1536
        %1569 = vst [vmem:[#allocation4 + $0x50] sm:$0xff] %v1537
        %1570 = vst [vmem:[#allocation4 + $0x58] sm:$0xff] %v1538
        %1571 = vst [vmem:[#allocation4 + $0x60] sm:$0xff] %v1539
        %1572 = vst [vmem:[#allocation4 + $0x68] sm:$0xff] %v1540
        %1573 = vst [vmem:[#allocation4 + $0x70] sm:$0xff] %v1541
        %1574 = vst [vmem:[#allocation4 + $0x78] sm:$0xff] %v1542
        %1575 = vst [vmem:[#allocation4 + $0x80] sm:$0xff] %v1543
        %1576 = vst [vmem:[#allocation4 + $0x88] sm:$0xff] %v1544
        %1577 = vst [vmem:[#allocation4 + $0x90] sm:$0xff] %v1545
        %1578 = vst [vmem:[#allocation4 + $0x98] sm:$0xff] %v1546
        %1579 = vst [vmem:[#allocation4 + $0xa0] sm:$0xff] %v1547
        %1580 = vst [vmem:[#allocation4 + $0xa8] sm:$0xff] %v1548
        %1581 = vst [vmem:[#allocation4 + $0xb0] sm:$0xff] %v1549
        %1582 = vst [vmem:[#allocation4 + $0xb8] sm:$0xff] %v1550
        %1583 = vst [vmem:[#allocation4 + $0xc0] sm:$0xff] %v1551
        %1584 = vst [vmem:[#allocation4 + $0xc8] sm:$0xff] %v1552
        %1585 = vst [vmem:[#allocation4 + $0xd0] sm:$0xff] %v1553
        %1586 = vst [vmem:[#allocation4 + $0xd8] sm:$0xff] %v1554
        %1587 = vst [vmem:[#allocation4 + $0xe0] sm:$0xff] %v1555
        %1588 = vst [vmem:[#allocation4 + $0xe8] sm:$0xff] %v1556
        %1589 = vst [vmem:[#allocation4 + $0xf0] sm:$0xff] %v1557
        %1590 = vst [vmem:[#allocation4 + $0xf8] sm:$0xff] %v1558
      $region32: #{tpu_custom_call.1} parent=27 // pred_fallthru
        _
      %v1591 = vld [vmem:[#allocation4] sm:$0xff]
      %v1592 = vld [vmem:[#allocation4 + $0x8] sm:$0xff]
      %v1593 = vld [vmem:[#allocation4 + $0x10] sm:$0xff]
      %v1594 = vld [vmem:[#allocation4 + $0x18] sm:$0xff]
      %v1595 = vld [vmem:[#allocation4 + $0x20] sm:$0xff]
      %v1596 = vld [vmem:[#allocation4 + $0x28] sm:$0xff]
      %v1597 = vld [vmem:[#allocation4 + $0x30] sm:$0xff]
      %v1598 = vld [vmem:[#allocation4 + $0x38] sm:$0xff]
      %v1599 = vld [vmem:[#allocation4 + $0x40] sm:$0xff]
      %v1600 = vld [vmem:[#allocation4 + $0x48] sm:$0xff]
      %v1601 = vld [vmem:[#allocation4 + $0x50] sm:$0xff]
      %v1602 = vld [vmem:[#allocation4 + $0x58] sm:$0xff]
      %v1603 = vld [vmem:[#allocation4 + $0x60] sm:$0xff]
      %v1604 = vld [vmem:[#allocation4 + $0x68] sm:$0xff]
      %v1605 = vld [vmem:[#allocation4 + $0x70] sm:$0xff]
      %v1606 = vld [vmem:[#allocation4 + $0x78] sm:$0xff]
      %v1607 = vld [vmem:[#allocation4 + $0x80] sm:$0xff]
      %v1608 = vld [vmem:[#allocation4 + $0x88] sm:$0xff]
      %v1609 = vld [vmem:[#allocation4 + $0x90] sm:$0xff]
      %v1610 = vld [vmem:[#allocation4 + $0x98] sm:$0xff]
      %v1611 = vld [vmem:[#allocation4 + $0xa0] sm:$0xff]
      %v1612 = vld [vmem:[#allocation4 + $0xa8] sm:$0xff]
      %v1613 = vld [vmem:[#allocation4 + $0xb0] sm:$0xff]
      %v1614 = vld [vmem:[#allocation4 + $0xb8] sm:$0xff]
      %v1615 = vld [vmem:[#allocation4 + $0xc0] sm:$0xff]
      %v1616 = vld [vmem:[#allocation4 + $0xc8] sm:$0xff]
      %v1617 = vld [vmem:[#allocation4 + $0xd0] sm:$0xff]
      %v1618 = vld [vmem:[#allocation4 + $0xd8] sm:$0xff]
      %v1619 = vld [vmem:[#allocation4 + $0xe0] sm:$0xff]
      %v1620 = vld [vmem:[#allocation4 + $0xe8] sm:$0xff]
      %v1621 = vld [vmem:[#allocation4 + $0xf0] sm:$0xff]
      %v1622 = vld [vmem:[#allocation4 + $0xf8] sm:$0xff]
      %1623 = vrot.lane.b32.xlu0 %v1591, 1
      %v1624 = vpop.permute.xlu0 %1623
      %1625 = vrot.lane.b32.xlu0 %v1592, 1
      %v1626 = vpop.permute.xlu0 %1625
      %1627 = vrot.lane.b32.xlu0 %v1593, 1
      %v1628 = vpop.permute.xlu0 %1627
      %1629 = vrot.lane.b32.xlu0 %v1594, 1
      %v1630 = vpop.permute.xlu0 %1629
      %1631 = vrot.lane.b32.xlu0 %v1595, 1
      %v1632 = vpop.permute.xlu0 %1631
      %1633 = vrot.lane.b32.xlu0 %v1596, 1
      %v1634 = vpop.permute.xlu0 %1633
      %1635 = vrot.lane.b32.xlu0 %v1597, 1
      %v1636 = vpop.permute.xlu0 %1635
      %1637 = vrot.lane.b32.xlu0 %v1598, 1
      %v1638 = vpop.permute.xlu0 %1637
      %1639 = vrot.lane.b32.xlu0 %v1599, 1
      %v1640 = vpop.permute.xlu0 %1639
      %1641 = vrot.lane.b32.xlu0 %v1600, 1
      %v1642 = vpop.permute.xlu0 %1641
      %1643 = vrot.lane.b32.xlu0 %v1601, 1
      %v1644 = vpop.permute.xlu0 %1643
      %1645 = vrot.lane.b32.xlu0 %v1602, 1
      %v1646 = vpop.permute.xlu0 %1645
      %1647 = vrot.lane.b32.xlu0 %v1603, 1
      %v1648 = vpop.permute.xlu0 %1647
      %1649 = vrot.lane.b32.xlu0 %v1604, 1
      %v1650 = vpop.permute.xlu0 %1649
      %1651 = vrot.lane.b32.xlu0 %v1605, 1
      %v1652 = vpop.permute.xlu0 %1651
      %1653 = vrot.lane.b32.xlu0 %v1606, 1
      %v1654 = vpop.permute.xlu0 %1653
      %1655 = vrot.lane.b32.xlu0 %v1607, 1
      %v1656 = vpop.permute.xlu0 %1655
      %1657 = vrot.lane.b32.xlu0 %v1608, 1
      %v1658 = vpop.permute.xlu0 %1657
      %1659 = vrot.lane.b32.xlu0 %v1609, 1
      %v1660 = vpop.permute.xlu0 %1659
      %1661 = vrot.lane.b32.xlu0 %v1610, 1
      %v1662 = vpop.permute.xlu0 %1661
      %1663 = vrot.lane.b32.xlu0 %v1611, 1
      %v1664 = vpop.permute.xlu0 %1663
      %1665 = vrot.lane.b32.xlu0 %v1612, 1
      %v1666 = vpop.permute.xlu0 %1665
      %1667 = vrot.lane.b32.xlu0 %v1613, 1
      %v1668 = vpop.permute.xlu0 %1667
      %1669 = vrot.lane.b32.xlu0 %v1614, 1
      %v1670 = vpop.permute.xlu0 %1669
      %1671 = vrot.lane.b32.xlu0 %v1615, 1
      %v1672 = vpop.permute.xlu0 %1671
      %1673 = vrot.lane.b32.xlu0 %v1616, 1
      %v1674 = vpop.permute.xlu0 %1673
      %1675 = vrot.lane.b32.xlu0 %v1617, 1
      %v1676 = vpop.permute.xlu0 %1675
      %1677 = vrot.lane.b32.xlu0 %v1618, 1
      %v1678 = vpop.permute.xlu0 %1677
      %1679 = vrot.lane.b32.xlu0 %v1619, 1
      %v1680 = vpop.permute.xlu0 %1679
      %1681 = vrot.lane.b32.xlu0 %v1620, 1
      %v1682 = vpop.permute.xlu0 %1681
      %1683 = vrot.lane.b32.xlu0 %v1621, 1
      %v1684 = vpop.permute.xlu0 %1683
      %1685 = vrot.lane.b32.xlu0 %v1622, 1
      %v1686 = vpop.permute.xlu0 %1685
      %v1687 = vmul.f32 %v1591, %v1624
      %v1688 = vmul.f32 %v1592, %v1626
      %v1689 = vmul.f32 %v1593, %v1628
      %v1690 = vmul.f32 %v1594, %v1630
      %v1691 = vmul.f32 %v1595, %v1632
      %v1692 = vmul.f32 %v1596, %v1634
      %v1693 = vmul.f32 %v1597, %v1636
      %v1694 = vmul.f32 %v1598, %v1638
      %v1695 = vmul.f32 %v1599, %v1640
      %v1696 = vmul.f32 %v1600, %v1642
      %v1697 = vmul.f32 %v1601, %v1644
      %v1698 = vmul.f32 %v1602, %v1646
      %v1699 = vmul.f32 %v1603, %v1648
      %v1700 = vmul.f32 %v1604, %v1650
      %v1701 = vmul.f32 %v1605, %v1652
      %v1702 = vmul.f32 %v1606, %v1654
      %v1703 = vmul.f32 %v1607, %v1656
      %v1704 = vmul.f32 %v1608, %v1658
      %v1705 = vmul.f32 %v1609, %v1660
      %v1706 = vmul.f32 %v1610, %v1662
      %v1707 = vmul.f32 %v1611, %v1664
      %v1708 = vmul.f32 %v1612, %v1666
      %v1709 = vmul.f32 %v1613, %v1668
      %v1710 = vmul.f32 %v1614, %v1670
      %v1711 = vmul.f32 %v1615, %v1672
      %v1712 = vmul.f32 %v1616, %v1674
      %v1713 = vmul.f32 %v1617, %v1676
      %v1714 = vmul.f32 %v1618, %v1678
      %v1715 = vmul.f32 %v1619, %v1680
      %v1716 = vmul.f32 %v1620, %v1682
      %v1717 = vmul.f32 %v1621, %v1684
      %v1718 = vmul.f32 %v1622, %v1686
      %1719 = vrot.lane.b32.xlu0 %v1687, 2
      %v1720 = vpop.permute.xlu0 %1719
      %1721 = vrot.lane.b32.xlu0 %v1688, 2
      %v1722 = vpop.permute.xlu0 %1721
      %1723 = vrot.lane.b32.xlu0 %v1689, 2
      %v1724 = vpop.permute.xlu0 %1723
      %1725 = vrot.lane.b32.xlu0 %v1690, 2
      %v1726 = vpop.permute.xlu0 %1725
      %1727 = vrot.lane.b32.xlu0 %v1691, 2
      %v1728 = vpop.permute.xlu0 %1727
      %1729 = vrot.lane.b32.xlu0 %v1692, 2
      %v1730 = vpop.permute.xlu0 %1729
      %1731 = vrot.lane.b32.xlu0 %v1693, 2
      %v1732 = vpop.permute.xlu0 %1731
      %1733 = vrot.lane.b32.xlu0 %v1694, 2
      %v1734 = vpop.permute.xlu0 %1733
      %1735 = vrot.lane.b32.xlu0 %v1695, 2
      %v1736 = vpop.permute.xlu0 %1735
      %1737 = vrot.lane.b32.xlu0 %v1696, 2
      %v1738 = vpop.permute.xlu0 %1737
      %1739 = vrot.lane.b32.xlu0 %v1697, 2
      %v1740 = vpop.permute.xlu0 %1739
      %1741 = vrot.lane.b32.xlu0 %v1698, 2
      %v1742 = vpop.permute.xlu0 %1741
      %1743 = vrot.lane.b32.xlu0 %v1699, 2
      %v1744 = vpop.permute.xlu0 %1743
      %1745 = vrot.lane.b32.xlu0 %v1700, 2
      %v1746 = vpop.permute.xlu0 %1745
      %1747 = vrot.lane.b32.xlu0 %v1701, 2
      %v1748 = vpop.permute.xlu0 %1747
      %1749 = vrot.lane.b32.xlu0 %v1702, 2
      %v1750 = vpop.permute.xlu0 %1749
      %1751 = vrot.lane.b32.xlu0 %v1703, 2
      %v1752 = vpop.permute.xlu0 %1751
      %1753 = vrot.lane.b32.xlu0 %v1704, 2
      %v1754 = vpop.permute.xlu0 %1753
      %1755 = vrot.lane.b32.xlu0 %v1705, 2
      %v1756 = vpop.permute.xlu0 %1755
      %1757 = vrot.lane.b32.xlu0 %v1706, 2
      %v1758 = vpop.permute.xlu0 %1757
      %1759 = vrot.lane.b32.xlu0 %v1707, 2
      %v1760 = vpop.permute.xlu0 %1759
      %1761 = vrot.lane.b32.xlu0 %v1708, 2
      %v1762 = vpop.permute.xlu0 %1761
      %1763 = vrot.lane.b32.xlu0 %v1709, 2
      %v1764 = vpop.permute.xlu0 %1763
      %1765 = vrot.lane.b32.xlu0 %v1710, 2
      %v1766 = vpop.permute.xlu0 %1765
      %1767 = vrot.lane.b32.xlu0 %v1711, 2
      %v1768 = vpop.permute.xlu0 %1767
      %1769 = vrot.lane.b32.xlu0 %v1712, 2
      %v1770 = vpop.permute.xlu0 %1769
      %1771 = vrot.lane.b32.xlu0 %v1713, 2
      %v1772 = vpop.permute.xlu0 %1771
      %1773 = vrot.lane.b32.xlu0 %v1714, 2
      %v1774 = vpop.permute.xlu0 %1773
      %1775 = vrot.lane.b32.xlu0 %v1715, 2
      %v1776 = vpop.permute.xlu0 %1775
      %1777 = vrot.lane.b32.xlu0 %v1716, 2
      %v1778 = vpop.permute.xlu0 %1777
      %1779 = vrot.lane.b32.xlu0 %v1717, 2
      %v1780 = vpop.permute.xlu0 %1779
      %1781 = vrot.lane.b32.xlu0 %v1718, 2
      %v1782 = vpop.permute.xlu0 %1781
      %v1783 = vmul.f32 %v1687, %v1720
      %v1784 = vmul.f32 %v1688, %v1722
      %v1785 = vmul.f32 %v1689, %v1724
      %v1786 = vmul.f32 %v1690, %v1726
      %v1787 = vmul.f32 %v1691, %v1728
      %v1788 = vmul.f32 %v1692, %v1730
      %v1789 = vmul.f32 %v1693, %v1732
      %v1790 = vmul.f32 %v1694, %v1734
      %v1791 = vmul.f32 %v1695, %v1736
      %v1792 = vmul.f32 %v1696, %v1738
      %v1793 = vmul.f32 %v1697, %v1740
      %v1794 = vmul.f32 %v1698, %v1742
      %v1795 = vmul.f32 %v1699, %v1744
      %v1796 = vmul.f32 %v1700, %v1746
      %v1797 = vmul.f32 %v1701, %v1748
      %v1798 = vmul.f32 %v1702, %v1750
      %v1799 = vmul.f32 %v1703, %v1752
      %v1800 = vmul.f32 %v1704, %v1754
      %v1801 = vmul.f32 %v1705, %v1756
      %v1802 = vmul.f32 %v1706, %v1758
      %v1803 = vmul.f32 %v1707, %v1760
      %v1804 = vmul.f32 %v1708, %v1762
      %v1805 = vmul.f32 %v1709, %v1764
      %v1806 = vmul.f32 %v1710, %v1766
      %v1807 = vmul.f32 %v1711, %v1768
      %v1808 = vmul.f32 %v1712, %v1770
      %v1809 = vmul.f32 %v1713, %v1772
      %v1810 = vmul.f32 %v1714, %v1774
      %v1811 = vmul.f32 %v1715, %v1776
      %v1812 = vmul.f32 %v1716, %v1778
      %v1813 = vmul.f32 %v1717, %v1780
      %v1814 = vmul.f32 %v1718, %v1782
      %1815 = vrot.lane.b32.xlu0 %v1783, 4
      %v1816 = vpop.permute.xlu0 %1815
      %1817 = vrot.lane.b32.xlu0 %v1784, 4
      %v1818 = vpop.permute.xlu0 %1817
      %1819 = vrot.lane.b32.xlu0 %v1785, 4
      %v1820 = vpop.permute.xlu0 %1819
      %1821 = vrot.lane.b32.xlu0 %v1786, 4
      %v1822 = vpop.permute.xlu0 %1821
      %1823 = vrot.lane.b32.xlu0 %v1787, 4
      %v1824 = vpop.permute.xlu0 %1823
      %1825 = vrot.lane.b32.xlu0 %v1788, 4
      %v1826 = vpop.permute.xlu0 %1825
      %1827 = vrot.lane.b32.xlu0 %v1789, 4
      %v1828 = vpop.permute.xlu0 %1827
      %1829 = vrot.lane.b32.xlu0 %v1790, 4
      %v1830 = vpop.permute.xlu0 %1829
      %1831 = vrot.lane.b32.xlu0 %v1791, 4
      %v1832 = vpop.permute.xlu0 %1831
      %1833 = vrot.lane.b32.xlu0 %v1792, 4
      %v1834 = vpop.permute.xlu0 %1833
      %1835 = vrot.lane.b32.xlu0 %v1793, 4
      %v1836 = vpop.permute.xlu0 %1835
      %1837 = vrot.lane.b32.xlu0 %v1794, 4
      %v1838 = vpop.permute.xlu0 %1837
      %1839 = vrot.lane.b32.xlu0 %v1795, 4
      %v1840 = vpop.permute.xlu0 %1839
      %1841 = vrot.lane.b32.xlu0 %v1796, 4
      %v1842 = vpop.permute.xlu0 %1841
      %1843 = vrot.lane.b32.xlu0 %v1797, 4
      %v1844 = vpop.permute.xlu0 %1843
      %1845 = vrot.lane.b32.xlu0 %v1798, 4
      %v1846 = vpop.permute.xlu0 %1845
      %1847 = vrot.lane.b32.xlu0 %v1799, 4
      %v1848 = vpop.permute.xlu0 %1847
      %1849 = vrot.lane.b32.xlu0 %v1800, 4
      %v1850 = vpop.permute.xlu0 %1849
      %1851 = vrot.lane.b32.xlu0 %v1801, 4
      %v1852 = vpop.permute.xlu0 %1851
      %1853 = vrot.lane.b32.xlu0 %v1802, 4
      %v1854 = vpop.permute.xlu0 %1853
      %1855 = vrot.lane.b32.xlu0 %v1803, 4
      %v1856 = vpop.permute.xlu0 %1855
      %1857 = vrot.lane.b32.xlu0 %v1804, 4
      %v1858 = vpop.permute.xlu0 %1857
      %1859 = vrot.lane.b32.xlu0 %v1805, 4
      %v1860 = vpop.permute.xlu0 %1859
      %1861 = vrot.lane.b32.xlu0 %v1806, 4
      %v1862 = vpop.permute.xlu0 %1861
      %1863 = vrot.lane.b32.xlu0 %v1807, 4
      %v1864 = vpop.permute.xlu0 %1863
      %1865 = vrot.lane.b32.xlu0 %v1808, 4
      %v1866 = vpop.permute.xlu0 %1865
      %1867 = vrot.lane.b32.xlu0 %v1809, 4
      %v1868 = vpop.permute.xlu0 %1867
      %1869 = vrot.lane.b32.xlu0 %v1810, 4
      %v1870 = vpop.permute.xlu0 %1869
      %1871 = vrot.lane.b32.xlu0 %v1811, 4
      %v1872 = vpop.permute.xlu0 %1871
      %1873 = vrot.lane.b32.xlu0 %v1812, 4
      %v1874 = vpop.permute.xlu0 %1873
      %1875 = vrot.lane.b32.xlu0 %v1813, 4
      %v1876 = vpop.permute.xlu0 %1875
      %1877 = vrot.lane.b32.xlu0 %v1814, 4
      %v1878 = vpop.permute.xlu0 %1877
      %v1879 = vmul.f32 %v1783, %v1816
      %v1880 = vmul.f32 %v1784, %v1818
      %v1881 = vmul.f32 %v1785, %v1820
      %v1882 = vmul.f32 %v1786, %v1822
      %v1883 = vmul.f32 %v1787, %v1824
      %v1884 = vmul.f32 %v1788, %v1826
      %v1885 = vmul.f32 %v1789, %v1828
      %v1886 = vmul.f32 %v1790, %v1830
      %v1887 = vmul.f32 %v1791, %v1832
      %v1888 = vmul.f32 %v1792, %v1834
      %v1889 = vmul.f32 %v1793, %v1836
      %v1890 = vmul.f32 %v1794, %v1838
      %v1891 = vmul.f32 %v1795, %v1840
      %v1892 = vmul.f32 %v1796, %v1842
      %v1893 = vmul.f32 %v1797, %v1844
      %v1894 = vmul.f32 %v1798, %v1846
      %v1895 = vmul.f32 %v1799, %v1848
      %v1896 = vmul.f32 %v1800, %v1850
      %v1897 = vmul.f32 %v1801, %v1852
      %v1898 = vmul.f32 %v1802, %v1854
      %v1899 = vmul.f32 %v1803, %v1856
      %v1900 = vmul.f32 %v1804, %v1858
      %v1901 = vmul.f32 %v1805, %v1860
      %v1902 = vmul.f32 %v1806, %v1862
      %v1903 = vmul.f32 %v1807, %v1864
      %v1904 = vmul.f32 %v1808, %v1866
      %v1905 = vmul.f32 %v1809, %v1868
      %v1906 = vmul.f32 %v1810, %v1870
      %v1907 = vmul.f32 %v1811, %v1872
      %v1908 = vmul.f32 %v1812, %v1874
      %v1909 = vmul.f32 %v1813, %v1876
      %v1910 = vmul.f32 %v1814, %v1878
      %1911 = vrot.lane.b32.xlu0 %v1879, 8
      %v1912 = vpop.permute.xlu0 %1911
      %1913 = vrot.lane.b32.xlu0 %v1880, 8
      %v1914 = vpop.permute.xlu0 %1913
      %1915 = vrot.lane.b32.xlu0 %v1881, 8
      %v1916 = vpop.permute.xlu0 %1915
      %1917 = vrot.lane.b32.xlu0 %v1882, 8
      %v1918 = vpop.permute.xlu0 %1917
      %1919 = vrot.lane.b32.xlu0 %v1883, 8
      %v1920 = vpop.permute.xlu0 %1919
      %1921 = vrot.lane.b32.xlu0 %v1884, 8
      %v1922 = vpop.permute.xlu0 %1921
      %1923 = vrot.lane.b32.xlu0 %v1885, 8
      %v1924 = vpop.permute.xlu0 %1923
      %1925 = vrot.lane.b32.xlu0 %v1886, 8
      %v1926 = vpop.permute.xlu0 %1925
      %1927 = vrot.lane.b32.xlu0 %v1887, 8
      %v1928 = vpop.permute.xlu0 %1927
      %1929 = vrot.lane.b32.xlu0 %v1888, 8
      %v1930 = vpop.permute.xlu0 %1929
      %1931 = vrot.lane.b32.xlu0 %v1889, 8
      %v1932 = vpop.permute.xlu0 %1931
      %1933 = vrot.lane.b32.xlu0 %v1890, 8
      %v1934 = vpop.permute.xlu0 %1933
      %1935 = vrot.lane.b32.xlu0 %v1891, 8
      %v1936 = vpop.permute.xlu0 %1935
      %1937 = vrot.lane.b32.xlu0 %v1892, 8
      %v1938 = vpop.permute.xlu0 %1937
      %1939 = vrot.lane.b32.xlu0 %v1893, 8
      %v1940 = vpop.permute.xlu0 %1939
      %1941 = vrot.lane.b32.xlu0 %v1894, 8
      %v1942 = vpop.permute.xlu0 %1941
      %1943 = vrot.lane.b32.xlu0 %v1895, 8
      %v1944 = vpop.permute.xlu0 %1943
      %1945 = vrot.lane.b32.xlu0 %v1896, 8
      %v1946 = vpop.permute.xlu0 %1945
      %1947 = vrot.lane.b32.xlu0 %v1897, 8
      %v1948 = vpop.permute.xlu0 %1947
      %1949 = vrot.lane.b32.xlu0 %v1898, 8
      %v1950 = vpop.permute.xlu0 %1949
      %1951 = vrot.lane.b32.xlu0 %v1899, 8
      %v1952 = vpop.permute.xlu0 %1951
      %1953 = vrot.lane.b32.xlu0 %v1900, 8
      %v1954 = vpop.permute.xlu0 %1953
      %1955 = vrot.lane.b32.xlu0 %v1901, 8
      %v1956 = vpop.permute.xlu0 %1955
      %1957 = vrot.lane.b32.xlu0 %v1902, 8
      %v1958 = vpop.permute.xlu0 %1957
      %1959 = vrot.lane.b32.xlu0 %v1903, 8
      %v1960 = vpop.permute.xlu0 %1959
      %1961 = vrot.lane.b32.xlu0 %v1904, 8
      %v1962 = vpop.permute.xlu0 %1961
      %1963 = vrot.lane.b32.xlu0 %v1905, 8
      %v1964 = vpop.permute.xlu0 %1963
      %1965 = vrot.lane.b32.xlu0 %v1906, 8
      %v1966 = vpop.permute.xlu0 %1965
      %1967 = vrot.lane.b32.xlu0 %v1907, 8
      %v1968 = vpop.permute.xlu0 %1967
      %1969 = vrot.lane.b32.xlu0 %v1908, 8
      %v1970 = vpop.permute.xlu0 %1969
      %1971 = vrot.lane.b32.xlu0 %v1909, 8
      %v1972 = vpop.permute.xlu0 %1971
      %1973 = vrot.lane.b32.xlu0 %v1910, 8
      %v1974 = vpop.permute.xlu0 %1973
      %v1975 = vmul.f32 %v1879, %v1912
      %v1976 = vmul.f32 %v1880, %v1914
      %v1977 = vmul.f32 %v1881, %v1916
      %v1978 = vmul.f32 %v1882, %v1918
      %v1979 = vmul.f32 %v1883, %v1920
      %v1980 = vmul.f32 %v1884, %v1922
      %v1981 = vmul.f32 %v1885, %v1924
      %v1982 = vmul.f32 %v1886, %v1926
      %v1983 = vmul.f32 %v1887, %v1928
      %v1984 = vmul.f32 %v1888, %v1930
      %v1985 = vmul.f32 %v1889, %v1932
      %v1986 = vmul.f32 %v1890, %v1934
      %v1987 = vmul.f32 %v1891, %v1936
      %v1988 = vmul.f32 %v1892, %v1938
      %v1989 = vmul.f32 %v1893, %v1940
      %v1990 = vmul.f32 %v1894, %v1942
      %v1991 = vmul.f32 %v1895, %v1944
      %v1992 = vmul.f32 %v1896, %v1946
      %v1993 = vmul.f32 %v1897, %v1948
      %v1994 = vmul.f32 %v1898, %v1950
      %v1995 = vmul.f32 %v1899, %v1952
      %v1996 = vmul.f32 %v1900, %v1954
      %v1997 = vmul.f32 %v1901, %v1956
      %v1998 = vmul.f32 %v1902, %v1958
      %v1999 = vmul.f32 %v1903, %v1960
      %v2000 = vmul.f32 %v1904, %v1962
      %v2001 = vmul.f32 %v1905, %v1964
      %v2002 = vmul.f32 %v1906, %v1966
      %v2003 = vmul.f32 %v1907, %v1968
      %v2004 = vmul.f32 %v1908, %v1970
      %v2005 = vmul.f32 %v1909, %v1972
      %v2006 = vmul.f32 %v1910, %v1974
      %2007 = vrot.lane.b32.xlu0 %v1975, 16
      %v2008 = vpop.permute.xlu0 %2007
      %2009 = vrot.lane.b32.xlu0 %v1976, 16
      %v2010 = vpop.permute.xlu0 %2009
      %2011 = vrot.lane.b32.xlu0 %v1977, 16
      %v2012 = vpop.permute.xlu0 %2011
      %2013 = vrot.lane.b32.xlu0 %v1978, 16
      %v2014 = vpop.permute.xlu0 %2013
      %2015 = vrot.lane.b32.xlu0 %v1979, 16
      %v2016 = vpop.permute.xlu0 %2015
      %2017 = vrot.lane.b32.xlu0 %v1980, 16
      %v2018 = vpop.permute.xlu0 %2017
      %2019 = vrot.lane.b32.xlu0 %v1981, 16
      %v2020 = vpop.permute.xlu0 %2019
      %2021 = vrot.lane.b32.xlu0 %v1982, 16
      %v2022 = vpop.permute.xlu0 %2021
      %2023 = vrot.lane.b32.xlu0 %v1983, 16
      %v2024 = vpop.permute.xlu0 %2023
      %2025 = vrot.lane.b32.xlu0 %v1984, 16
      %v2026 = vpop.permute.xlu0 %2025
      %2027 = vrot.lane.b32.xlu0 %v1985, 16
      %v2028 = vpop.permute.xlu0 %2027
      %2029 = vrot.lane.b32.xlu0 %v1986, 16
      %v2030 = vpop.permute.xlu0 %2029
      %2031 = vrot.lane.b32.xlu0 %v1987, 16
      %v2032 = vpop.permute.xlu0 %2031
      %2033 = vrot.lane.b32.xlu0 %v1988, 16
      %v2034 = vpop.permute.xlu0 %2033
      %2035 = vrot.lane.b32.xlu0 %v1989, 16
      %v2036 = vpop.permute.xlu0 %2035
      %2037 = vrot.lane.b32.xlu0 %v1990, 16
      %v2038 = vpop.permute.xlu0 %2037
      %2039 = vrot.lane.b32.xlu0 %v1991, 16
      %v2040 = vpop.permute.xlu0 %2039
      %2041 = vrot.lane.b32.xlu0 %v1992, 16
      %v2042 = vpop.permute.xlu0 %2041
      %2043 = vrot.lane.b32.xlu0 %v1993, 16
      %v2044 = vpop.permute.xlu0 %2043
      %2045 = vrot.lane.b32.xlu0 %v1994, 16
      %v2046 = vpop.permute.xlu0 %2045
      %2047 = vrot.lane.b32.xlu0 %v1995, 16
      %v2048 = vpop.permute.xlu0 %2047
      %2049 = vrot.lane.b32.xlu0 %v1996, 16
      %v2050 = vpop.permute.xlu0 %2049
      %2051 = vrot.lane.b32.xlu0 %v1997, 16
      %v2052 = vpop.permute.xlu0 %2051
      %2053 = vrot.lane.b32.xlu0 %v1998, 16
      %v2054 = vpop.permute.xlu0 %2053
      %2055 = vrot.lane.b32.xlu0 %v1999, 16
      %v2056 = vpop.permute.xlu0 %2055
      %2057 = vrot.lane.b32.xlu0 %v2000, 16
      %v2058 = vpop.permute.xlu0 %2057
      %2059 = vrot.lane.b32.xlu0 %v2001, 16
      %v2060 = vpop.permute.xlu0 %2059
      %2061 = vrot.lane.b32.xlu0 %v2002, 16
      %v2062 = vpop.permute.xlu0 %2061
      %2063 = vrot.lane.b32.xlu0 %v2003, 16
      %v2064 = vpop.permute.xlu0 %2063
      %2065 = vrot.lane.b32.xlu0 %v2004, 16
      %v2066 = vpop.permute.xlu0 %2065
      %2067 = vrot.lane.b32.xlu0 %v2005, 16
      %v2068 = vpop.permute.xlu0 %2067
      %2069 = vrot.lane.b32.xlu0 %v2006, 16
      %v2070 = vpop.permute.xlu0 %2069
      %v2071 = vmul.f32 %v1975, %v2008
      %v2072 = vmul.f32 %v1976, %v2010
      %v2073 = vmul.f32 %v1977, %v2012
      %v2074 = vmul.f32 %v1978, %v2014
      %v2075 = vmul.f32 %v1979, %v2016
      %v2076 = vmul.f32 %v1980, %v2018
      %v2077 = vmul.f32 %v1981, %v2020
      %v2078 = vmul.f32 %v1982, %v2022
      %v2079 = vmul.f32 %v1983, %v2024
      %v2080 = vmul.f32 %v1984, %v2026
      %v2081 = vmul.f32 %v1985, %v2028
      %v2082 = vmul.f32 %v1986, %v2030
      %v2083 = vmul.f32 %v1987, %v2032
      %v2084 = vmul.f32 %v1988, %v2034
      %v2085 = vmul.f32 %v1989, %v2036
      %v2086 = vmul.f32 %v1990, %v2038
      %v2087 = vmul.f32 %v1991, %v2040
      %v2088 = vmul.f32 %v1992, %v2042
      %v2089 = vmul.f32 %v1993, %v2044
      %v2090 = vmul.f32 %v1994, %v2046
      %v2091 = vmul.f32 %v1995, %v2048
      %v2092 = vmul.f32 %v1996, %v2050
      %v2093 = vmul.f32 %v1997, %v2052
      %v2094 = vmul.f32 %v1998, %v2054
      %v2095 = vmul.f32 %v1999, %v2056
      %v2096 = vmul.f32 %v2000, %v2058
      %v2097 = vmul.f32 %v2001, %v2060
      %v2098 = vmul.f32 %v2002, %v2062
      %v2099 = vmul.f32 %v2003, %v2064
      %v2100 = vmul.f32 %v2004, %v2066
      %v2101 = vmul.f32 %v2005, %v2068
      %v2102 = vmul.f32 %v2006, %v2070
      %2103 = vrot.lane.b32.xlu0 %v2071, 32
      %v2104 = vpop.permute.xlu0 %2103
      %2105 = vrot.lane.b32.xlu0 %v2072, 32
      %v2106 = vpop.permute.xlu0 %2105
      %2107 = vrot.lane.b32.xlu0 %v2073, 32
      %v2108 = vpop.permute.xlu0 %2107
      %2109 = vrot.lane.b32.xlu0 %v2074, 32
      %v2110 = vpop.permute.xlu0 %2109
      %2111 = vrot.lane.b32.xlu0 %v2075, 32
      %v2112 = vpop.permute.xlu0 %2111
      %2113 = vrot.lane.b32.xlu0 %v2076, 32
      %v2114 = vpop.permute.xlu0 %2113
      %2115 = vrot.lane.b32.xlu0 %v2077, 32
      %v2116 = vpop.permute.xlu0 %2115
      %2117 = vrot.lane.b32.xlu0 %v2078, 32
      %v2118 = vpop.permute.xlu0 %2117
      %2119 = vrot.lane.b32.xlu0 %v2079, 32
      %v2120 = vpop.permute.xlu0 %2119
      %2121 = vrot.lane.b32.xlu0 %v2080, 32
      %v2122 = vpop.permute.xlu0 %2121
      %2123 = vrot.lane.b32.xlu0 %v2081, 32
      %v2124 = vpop.permute.xlu0 %2123
      %2125 = vrot.lane.b32.xlu0 %v2082, 32
      %v2126 = vpop.permute.xlu0 %2125
      %2127 = vrot.lane.b32.xlu0 %v2083, 32
      %v2128 = vpop.permute.xlu0 %2127
      %2129 = vrot.lane.b32.xlu0 %v2084, 32
      %v2130 = vpop.permute.xlu0 %2129
      %2131 = vrot.lane.b32.xlu0 %v2085, 32
      %v2132 = vpop.permute.xlu0 %2131
      %2133 = vrot.lane.b32.xlu0 %v2086, 32
      %v2134 = vpop.permute.xlu0 %2133
      %2135 = vrot.lane.b32.xlu0 %v2087, 32
      %v2136 = vpop.permute.xlu0 %2135
      %2137 = vrot.lane.b32.xlu0 %v2088, 32
      %v2138 = vpop.permute.xlu0 %2137
      %2139 = vrot.lane.b32.xlu0 %v2089, 32
      %v2140 = vpop.permute.xlu0 %2139
      %2141 = vrot.lane.b32.xlu0 %v2090, 32
      %v2142 = vpop.permute.xlu0 %2141
      %2143 = vrot.lane.b32.xlu0 %v2091, 32
      %v2144 = vpop.permute.xlu0 %2143
      %2145 = vrot.lane.b32.xlu0 %v2092, 32
      %v2146 = vpop.permute.xlu0 %2145
      %2147 = vrot.lane.b32.xlu0 %v2093, 32
      %v2148 = vpop.permute.xlu0 %2147
      %2149 = vrot.lane.b32.xlu0 %v2094, 32
      %v2150 = vpop.permute.xlu0 %2149
      %2151 = vrot.lane.b32.xlu0 %v2095, 32
      %v2152 = vpop.permute.xlu0 %2151
      %2153 = vrot.lane.b32.xlu0 %v2096, 32
      %v2154 = vpop.permute.xlu0 %2153
      %2155 = vrot.lane.b32.xlu0 %v2097, 32
      %v2156 = vpop.permute.xlu0 %2155
      %2157 = vrot.lane.b32.xlu0 %v2098, 32
      %v2158 = vpop.permute.xlu0 %2157
      %2159 = vrot.lane.b32.xlu0 %v2099, 32
      %v2160 = vpop.permute.xlu0 %2159
      %2161 = vrot.lane.b32.xlu0 %v2100, 32
      %v2162 = vpop.permute.xlu0 %2161
      %2163 = vrot.lane.b32.xlu0 %v2101, 32
      %v2164 = vpop.permute.xlu0 %2163
      %2165 = vrot.lane.b32.xlu0 %v2102, 32
      %v2166 = vpop.permute.xlu0 %2165
      %v2167 = vmul.f32 %v2071, %v2104
      %v2168 = vmul.f32 %v2072, %v2106
      %v2169 = vmul.f32 %v2073, %v2108
      %v2170 = vmul.f32 %v2074, %v2110
      %v2171 = vmul.f32 %v2075, %v2112
      %v2172 = vmul.f32 %v2076, %v2114
      %v2173 = vmul.f32 %v2077, %v2116
      %v2174 = vmul.f32 %v2078, %v2118
      %v2175 = vmul.f32 %v2079, %v2120
      %v2176 = vmul.f32 %v2080, %v2122
      %v2177 = vmul.f32 %v2081, %v2124
      %v2178 = vmul.f32 %v2082, %v2126
      %v2179 = vmul.f32 %v2083, %v2128
      %v2180 = vmul.f32 %v2084, %v2130
      %v2181 = vmul.f32 %v2085, %v2132
      %v2182 = vmul.f32 %v2086, %v2134
      %v2183 = vmul.f32 %v2087, %v2136
      %v2184 = vmul.f32 %v2088, %v2138
      %v2185 = vmul.f32 %v2089, %v2140
      %v2186 = vmul.f32 %v2090, %v2142
      %v2187 = vmul.f32 %v2091, %v2144
      %v2188 = vmul.f32 %v2092, %v2146
      %v2189 = vmul.f32 %v2093, %v2148
      %v2190 = vmul.f32 %v2094, %v2150
      %v2191 = vmul.f32 %v2095, %v2152
      %v2192 = vmul.f32 %v2096, %v2154
      %v2193 = vmul.f32 %v2097, %v2156
      %v2194 = vmul.f32 %v2098, %v2158
      %v2195 = vmul.f32 %v2099, %v2160
      %v2196 = vmul.f32 %v2100, %v2162
      %v2197 = vmul.f32 %v2101, %v2164
      %v2198 = vmul.f32 %v2102, %v2166
      %2199 = vrot.lane.b32.xlu0 %v2167, 64
      %v2200 = vpop.permute.xlu0 %2199
      %2201 = vrot.lane.b32.xlu0 %v2168, 64
      %v2202 = vpop.permute.xlu0 %2201
      %2203 = vrot.lane.b32.xlu0 %v2169, 64
      %v2204 = vpop.permute.xlu0 %2203
      %2205 = vrot.lane.b32.xlu0 %v2170, 64
      %v2206 = vpop.permute.xlu0 %2205
      %2207 = vrot.lane.b32.xlu0 %v2171, 64
      %v2208 = vpop.permute.xlu0 %2207
      %2209 = vrot.lane.b32.xlu0 %v2172, 64
      %v2210 = vpop.permute.xlu0 %2209
      %2211 = vrot.lane.b32.xlu0 %v2173, 64
      %v2212 = vpop.permute.xlu0 %2211
      %2213 = vrot.lane.b32.xlu0 %v2174, 64
      %v2214 = vpop.permute.xlu0 %2213
      %2215 = vrot.lane.b32.xlu0 %v2175, 64
      %v2216 = vpop.permute.xlu0 %2215
      %2217 = vrot.lane.b32.xlu0 %v2176, 64
      %v2218 = vpop.permute.xlu0 %2217
      %2219 = vrot.lane.b32.xlu0 %v2177, 64
      %v2220 = vpop.permute.xlu0 %2219
      %2221 = vrot.lane.b32.xlu0 %v2178, 64
      %v2222 = vpop.permute.xlu0 %2221
      %2223 = vrot.lane.b32.xlu0 %v2179, 64
      %v2224 = vpop.permute.xlu0 %2223
      %2225 = vrot.lane.b32.xlu0 %v2180, 64
      %v2226 = vpop.permute.xlu0 %2225
      %2227 = vrot.lane.b32.xlu0 %v2181, 64
      %v2228 = vpop.permute.xlu0 %2227
      %2229 = vrot.lane.b32.xlu0 %v2182, 64
      %v2230 = vpop.permute.xlu0 %2229
      %2231 = vrot.lane.b32.xlu0 %v2183, 64
      %v2232 = vpop.permute.xlu0 %2231
      %2233 = vrot.lane.b32.xlu0 %v2184, 64
      %v2234 = vpop.permute.xlu0 %2233
      %2235 = vrot.lane.b32.xlu0 %v2185, 64
      %v2236 = vpop.permute.xlu0 %2235
      %2237 = vrot.lane.b32.xlu0 %v2186, 64
      %v2238 = vpop.permute.xlu0 %2237
      %2239 = vrot.lane.b32.xlu0 %v2187, 64
      %v2240 = vpop.permute.xlu0 %2239
      %2241 = vrot.lane.b32.xlu0 %v2188, 64
      %v2242 = vpop.permute.xlu0 %2241
      %2243 = vrot.lane.b32.xlu0 %v2189, 64
      %v2244 = vpop.permute.xlu0 %2243
      %2245 = vrot.lane.b32.xlu0 %v2190, 64
      %v2246 = vpop.permute.xlu0 %2245
      %2247 = vrot.lane.b32.xlu0 %v2191, 64
      %v2248 = vpop.permute.xlu0 %2247
      %2249 = vrot.lane.b32.xlu0 %v2192, 64
      %v2250 = vpop.permute.xlu0 %2249
      %2251 = vrot.lane.b32.xlu0 %v2193, 64
      %v2252 = vpop.permute.xlu0 %2251
      %2253 = vrot.lane.b32.xlu0 %v2194, 64
      %v2254 = vpop.permute.xlu0 %2253
      %2255 = vrot.lane.b32.xlu0 %v2195, 64
      %v2256 = vpop.permute.xlu0 %2255
      %2257 = vrot.lane.b32.xlu0 %v2196, 64
      %v2258 = vpop.permute.xlu0 %2257
      %2259 = vrot.lane.b32.xlu0 %v2197, 64
      %v2260 = vpop.permute.xlu0 %2259
      %2261 = vrot.lane.b32.xlu0 %v2198, 64
      %v2262 = vpop.permute.xlu0 %2261
      %v2263 = vmul.f32 %v2167, %v2200
      %v2264 = vmul.f32 %v2168, %v2202
      %v2265 = vmul.f32 %v2169, %v2204
      %v2266 = vmul.f32 %v2170, %v2206
      %v2267 = vmul.f32 %v2171, %v2208
      %v2268 = vmul.f32 %v2172, %v2210
      %v2269 = vmul.f32 %v2173, %v2212
      %v2270 = vmul.f32 %v2174, %v2214
      %v2271 = vmul.f32 %v2175, %v2216
      %v2272 = vmul.f32 %v2176, %v2218
      %v2273 = vmul.f32 %v2177, %v2220
      %v2274 = vmul.f32 %v2178, %v2222
      %v2275 = vmul.f32 %v2179, %v2224
      %v2276 = vmul.f32 %v2180, %v2226
      %v2277 = vmul.f32 %v2181, %v2228
      %v2278 = vmul.f32 %v2182, %v2230
      %v2279 = vmul.f32 %v2183, %v2232
      %v2280 = vmul.f32 %v2184, %v2234
      %v2281 = vmul.f32 %v2185, %v2236
      %v2282 = vmul.f32 %v2186, %v2238
      %v2283 = vmul.f32 %v2187, %v2240
      %v2284 = vmul.f32 %v2188, %v2242
      %v2285 = vmul.f32 %v2189, %v2244
      %v2286 = vmul.f32 %v2190, %v2246
      %v2287 = vmul.f32 %v2191, %v2248
      %v2288 = vmul.f32 %v2192, %v2250
      %v2289 = vmul.f32 %v2193, %v2252
      %v2290 = vmul.f32 %v2194, %v2254
      %v2291 = vmul.f32 %v2195, %v2256
      %v2292 = vmul.f32 %v2196, %v2258
      %v2293 = vmul.f32 %v2197, %v2260
      %v2294 = vmul.f32 %v2198, %v2262
      %v2295 = vsub.f32 1.0, %v2263
      %v2296 = vsub.f32 1.0, %v2264
      %v2297 = vsub.f32 1.0, %v2265
      %v2298 = vsub.f32 1.0, %v2266
      %v2299 = vsub.f32 1.0, %v2267
      %v2300 = vsub.f32 1.0, %v2268
      %v2301 = vsub.f32 1.0, %v2269
      %v2302 = vsub.f32 1.0, %v2270
      %v2303 = vsub.f32 1.0, %v2271
      %v2304 = vsub.f32 1.0, %v2272
      %v2305 = vsub.f32 1.0, %v2273
      %v2306 = vsub.f32 1.0, %v2274
      %v2307 = vsub.f32 1.0, %v2275
      %v2308 = vsub.f32 1.0, %v2276
      %v2309 = vsub.f32 1.0, %v2277
      %v2310 = vsub.f32 1.0, %v2278
      %v2311 = vsub.f32 1.0, %v2279
      %v2312 = vsub.f32 1.0, %v2280
      %v2313 = vsub.f32 1.0, %v2281
      %v2314 = vsub.f32 1.0, %v2282
      %v2315 = vsub.f32 1.0, %v2283
      %v2316 = vsub.f32 1.0, %v2284
      %v2317 = vsub.f32 1.0, %v2285
      %v2318 = vsub.f32 1.0, %v2286
      %v2319 = vsub.f32 1.0, %v2287
      %v2320 = vsub.f32 1.0, %v2288
      %v2321 = vsub.f32 1.0, %v2289
      %v2322 = vsub.f32 1.0, %v2290
      %v2323 = vsub.f32 1.0, %v2291
      %v2324 = vsub.f32 1.0, %v2292
      %v2325 = vsub.f32 1.0, %v2293
      %v2326 = vsub.f32 1.0, %v2294
      %vm2327 = vcmask 7168
      %2328 = vst.msk [vmem:[%s202] sm:$0xff] %vm2327, %v2295
      %2329 = vst.msk [vmem:[%s202 + $0x8] sm:$0xff] %vm2327, %v2296
      %2330 = vst.msk [vmem:[%s202 + $0x10] sm:$0xff] %vm2327, %v2297
      %2331 = vst.msk [vmem:[%s202 + $0x18] sm:$0xff] %vm2327, %v2298
      %2332 = vst.msk [vmem:[%s202 + $0x20] sm:$0xff] %vm2327, %v2299
      %2333 = vst.msk [vmem:[%s202 + $0x28] sm:$0xff] %vm2327, %v2300
      %2334 = vst.msk [vmem:[%s202 + $0x30] sm:$0xff] %vm2327, %v2301
      %2335 = vst.msk [vmem:[%s202 + $0x38] sm:$0xff] %vm2327, %v2302
      %2336 = vst.msk [vmem:[%s202 + $0x40] sm:$0xff] %vm2327, %v2303
      %2337 = vst.msk [vmem:[%s202 + $0x48] sm:$0xff] %vm2327, %v2304
      %2338 = vst.msk [vmem:[%s202 + $0x50] sm:$0xff] %vm2327, %v2305
      %2339 = vst.msk [vmem:[%s202 + $0x58] sm:$0xff] %vm2327, %v2306
      %2340 = vst.msk [vmem:[%s202 + $0x60] sm:$0xff] %vm2327, %v2307
      %2341 = vst.msk [vmem:[%s202 + $0x68] sm:$0xff] %vm2327, %v2308
      %2342 = vst.msk [vmem:[%s202 + $0x70] sm:$0xff] %vm2327, %v2309
      %2343 = vst.msk [vmem:[%s202 + $0x78] sm:$0xff] %vm2327, %v2310
      %2344 = vst.msk [vmem:[%s202 + $0x80] sm:$0xff] %vm2327, %v2311
      %2345 = vst.msk [vmem:[%s202 + $0x88] sm:$0xff] %vm2327, %v2312
      %2346 = vst.msk [vmem:[%s202 + $0x90] sm:$0xff] %vm2327, %v2313
      %2347 = vst.msk [vmem:[%s202 + $0x98] sm:$0xff] %vm2327, %v2314
      %2348 = vst.msk [vmem:[%s202 + $0xa0] sm:$0xff] %vm2327, %v2315
      %2349 = vst.msk [vmem:[%s202 + $0xa8] sm:$0xff] %vm2327, %v2316
      %2350 = vst.msk [vmem:[%s202 + $0xb0] sm:$0xff] %vm2327, %v2317
      %2351 = vst.msk [vmem:[%s202 + $0xb8] sm:$0xff] %vm2327, %v2318
      %2352 = vst.msk [vmem:[%s202 + $0xc0] sm:$0xff] %vm2327, %v2319
      %2353 = vst.msk [vmem:[%s202 + $0xc8] sm:$0xff] %vm2327, %v2320
      %2354 = vst.msk [vmem:[%s202 + $0xd0] sm:$0xff] %vm2327, %v2321
      %2355 = vst.msk [vmem:[%s202 + $0xd8] sm:$0xff] %vm2327, %v2322
      %2356 = vst.msk [vmem:[%s202 + $0xe0] sm:$0xff] %vm2327, %v2323
      %2357 = vst.msk [vmem:[%s202 + $0xe8] sm:$0xff] %vm2327, %v2324
      %2358 = vst.msk [vmem:[%s202 + $0xf0] sm:$0xff] %vm2327, %v2325
      %2359 = vst.msk [vmem:[%s202 + $0xf8] sm:$0xff] %vm2327, %v2326
      %s2360 = smul.u32 32, %s33
      %p2361 = scmp.lt.s32.totalorder %s32, 1
      %s2362 = scalar_select %p2361, %s32, 1
      %p2363 = scmp.lt.s32.totalorder %s2360, 31
      %s2364 = scalar_select %p2363, %s2360, 31
      %s2365 = smul.addr %s2362, 32
      %s2366 = sadd.s32 %s2364, %s2365
      %s2367 = smul.addr %s2366, 8
      %s2368 = scalar_lea.vmem %s4, %s2367
      // Predicated region
      $region33: #{tpu_custom_call.1} parent=27 // pred_check
        %p2369 = pneg %p112
      $region34: #{tpu_custom_call.1} parent=27 // pred_check_branch
        %2371 = sbr.rel (%p2369) target = $region36
      $region35: #{tpu_custom_call.1} parent=27 // pred_region
        %s2372 = smul.u32 32, %s33
      $region36: #{tpu_custom_call.1} parent=27 // pred_fallthru
        _
    $region28: #{tpu_custom_call.1} parent=5 // pred_fallthru
      _
    %p2373 = scmp.le.s32.totalorder 2, %s23
    // Predicated region
    $region37: #{tpu_custom_call.1} parent=5 // pred_check
      %p2374 = pneg %p2373
    $region38: #{tpu_custom_call.1} parent=5 // pred_check_branch
      %2376 = sbr.rel (%p2374) target = $region40
    $region39: #{tpu_custom_call.1} parent=5 // pred_region
      %s2377 = ssub.s32 %s23, 2
      // Predicated region
      $region41: #{tpu_custom_call.1} parent=39 // pred_check
        %p2378 = pneg %p118
      $region42: #{tpu_custom_call.1} parent=39 // pred_check_branch
        %2380 = sbr.rel (%p2378) target = $region44
      $region43: #{tpu_custom_call.1} parent=39 // pred_region
        %s2381 = smul.u32 32, %s35
        %p2382 = scmp.lt.s32.totalorder %s34, 1
        %s2383 = scalar_select %p2382, %s34, 1
        %p2384 = scmp.lt.s32.totalorder %s2381, 31
        %s2385 = scalar_select %p2384, %s2381, 31
        %s2386 = smul.addr %s2383, 32
        %s2387 = sadd.s32 %s2385, %s2386
        %s2388 = smul.addr %s2387, 8
        %s2389 = scalar_lea.vmem %s4, %s2388
      $region44: #{tpu_custom_call.1} parent=39 // pred_fallthru
        _
    $region40: #{tpu_custom_call.1} parent=5 // pred_fallthru
      _
  $region6: #{tpu_custom_call.1} parent=0 // loop_footer
    %s27 = sadd.s32 1, %s23
  $region7: #{tpu_custom_call.1} parent=0 // loop_footer_branch
    %22 = sbr.rel target = $region3
  $region8: #{tpu_custom_call.1} parent=0 // loop_exit
    _

</llo_original>
